<compile_context>
chip_gen: v7x
topology: tpu7x:2x2x1
jax: 0.10.0
libtpu: 0.0.40
codegen_flags: <defaults>
</compile_context>

<pallas_src>
import functools

import jax
import jax.numpy as jnp
from jax.experimental import pallas as pl
from jax.experimental.pallas import tpu as pltpu


# ----------------------------- Pallas kernel ------------------------------- #

def _redraw_scale_kernel(qT_ref, gT_ref, out_ref):
    """out = qT * ||G_col||  in transposed (dim_head, nb_features) layout.

    qT_ref / gT_ref / out_ref : (d, R) f32 tiles, R on the 128-lane axis.
    multiplier_j = L2 norm of the j-th d-dim gaussian column (sublane-axis
    reduction -> shape (1, R)), broadcast-multiplied onto the orthogonal
    columns.  All math in f32 (v5e has no bf16 VPU).
    """
    g = gT_ref[...]
    mult = jnp.sqrt(jnp.sum(g * g, axis=0, keepdims=True))      # (1, R)
    out_ref[...] = (mult * qT_ref[...]).astype(out_ref.dtype)


def _scale_projection_fused(q_t, g_t):
    """One pallas_call for ALL heads.

    q_t, g_t : (H, d, R) f32 — transposed orthogonal blocks and gaussians.
    Returns  : (H, d, R) f32 — scaled projection, still transposed.
    """
    H, D, R = q_t.shape
    return pl.pallas_call(
        _redraw_scale_kernel,
        out_shape=jax.ShapeDtypeStruct((H, D, R), jnp.float32),
        grid=(H,),
        in_specs=[pl.BlockSpec((None, D, R), lambda h: (h, 0, 0)),
                  pl.BlockSpec((None, D, R), lambda h: (h, 0, 0))],
        out_specs=pl.BlockSpec((None, D, R), lambda h: (h, 0, 0)),
        compiler_params=pltpu.CompilerParams(
            dimension_semantics=("parallel",),   # v7x: heads split across both TCs
        ),
    )(q_t, g_t)


# ------------------------- fused redraw (one jit) --------------------------- #

@functools.partial(jax.jit, static_argnums=(1, 2, 3))
def redraw_projection_matrices(key, num_heads, nb_features, dim_head):
    """Redraw gaussian-orthogonal projections for `num_heads` modules at once.

    Returns (num_heads, nb_features, dim_head) f32.
    """
    nb_blocks = -(-nb_features // dim_head)     # ceil: covers the remaining-rows path
    k_q, k_g = jax.random.split(key)

    # TODO(synk): QR orthogonalization has no Pallas primitive — batched
    # jnp.linalg.qr stays in XLA (fused under the same jit as the Pallas call).
    unstructured = jax.random.normal(
        k_q, (num_heads, nb_blocks, dim_head, dim_head), dtype=jnp.float32)
    q, _ = jnp.linalg.qr(unstructured)          # (H, nb_blocks, d, d)

    # Transposed (lane-dense) layout: proj = vstack(q_b.T)  =>  proj.T = hstack(q_b),
    # i.e. block b occupies columns [b*d, (b+1)*d) of (d, nb_blocks*d).
    q_t = jnp.transpose(q, (0, 2, 1, 3)).reshape(num_heads, dim_head,
                                                 nb_blocks * dim_head)
    q_t = q_t[:, :, :nb_features]               # drop extra columns if R % d != 0

    # Gaussian whose per-feature (per-column) norms are the multipliers,
    # matching gaussian_orthogonal_random_matrix(scaling=0).
    g_t = jax.random.normal(k_g, (num_heads, dim_head, nb_features),
                            dtype=jnp.float32)

    proj_t = _scale_projection_fused(q_t, g_t)           # (H, d, R) — Pallas
    return jnp.transpose(proj_t, (0, 2, 1))              # (H, R, d)


# ----------------------- Minimal FastAttention stand-in -------------------- #

class FastAttention:
    """Holds a gaussian-orthogonal projection matrix [nb_features, dim_head]."""

    def __init__(self, dim_head, nb_features, projection_matrix):
        self.dim_head = dim_head
        self.nb_features = nb_features
        self.projection_matrix = projection_matrix      # (nb_features, dim_head)

    def redraw_projection_matrix(self, key):
        # Single-module fallback; the updater uses the fused batched path instead.
        self.projection_matrix = redraw_projection_matrices(
            key, 1, self.nb_features, self.dim_head)[0]

    def modules(self):
        return [self]


class PerformerStub:
    """Tiny container with several FastAttention modules (one per head)."""

    def __init__(self, heads, dim_head, nb_features, key):
        projs = redraw_projection_matrices(key, heads, nb_features, dim_head)
        self.attns = [FastAttention(dim_head, nb_features, projs[h])
                      for h in range(heads)]

    def modules(self):
        mods = [self]
        for a in self.attns:
            mods.extend(a.modules())
        return mods


# ----------------------------- ProjectionUpdater --------------------------- #

class ProjectionUpdater:
    def __init__(self, instance, feature_redraw_interval):
        self.instance = instance
        self.feature_redraw_interval = feature_redraw_interval
        # register_buffer('calls_since_last_redraw', tensor(0)) — kept as a host
        # int: no per-step Pallas dispatch and no blocking device->host readback.
        self.calls_since_last_redraw = 0
        self.training = True
        self._redraw_key = jax.random.PRNGKey(1)

    def fix_projections_(self):
        self.feature_redraw_interval = None

    def redraw_projections(self):
        model = self.instance
        if not self.training:
            return
        if (self.feature_redraw_interval is not None
                and self.calls_since_last_redraw >= self.feature_redraw_interval):
            fast_attentions = [m for m in model.modules()
                               if isinstance(m, FastAttention)]
            # Fuse all modules with identical shapes into ONE jitted
            # (batched QR + single grid-parallel pallas_call) redraw.
            groups = {}
            for fa in fast_attentions:
                groups.setdefault((fa.nb_features, fa.dim_head), []).append(fa)
            for (nb_features, dim_head), mods in groups.items():
                self._redraw_key, sub = jax.random.split(self._redraw_key)
                projs = redraw_projection_matrices(sub, len(mods),
                                                   nb_features, dim_head)
                for h, fa in enumerate(mods):
                    fa.projection_matrix = projs[h]
            self.calls_since_last_redraw = 0
            return
        self.calls_since_last_redraw += 1

    def forward(self, x):
        # TODO(synk): reference forward raises NotImplemented — no tensor compute to port.
        raise NotImplementedError


# ----------------------------------- main ----------------------------------- #

if __name__ == "__main__":
    dim_head, nb_features, heads = 32, 128, 2   # R=128 -> fully lane-dense tiles
    key = jax.random.PRNGKey(0)
    k_model, k_chk = jax.random.split(key)

    model = PerformerStub(heads, dim_head, nb_features, k_model)
    updater = ProjectionUpdater(model, feature_redraw_interval=2)

    before = [jax.block_until_ready(fa.projection_matrix) for fa in model.attns]

    # Drive the state machine: two counting calls (host int), then a call that
    # triggers the fused Pallas-backed projection redraw.
    for _ in range(3):
        updater.redraw_projections()

    after = [jax.block_until_ready(fa.projection_matrix) for fa in model.attns]
    assert updater.calls_since_last_redraw == 0          # reset by the redraw
    for b, a in zip(before, after):
        assert a.shape == (nb_features, dim_head)
        assert not bool(jnp.allclose(a, b))               # redraw changed the matrices

    # Exact reference check of the Pallas hot path: every output column must be
    # the matching orthogonal column scaled by that column's gaussian norm.
    k_q, k_g = jax.random.split(k_chk)
    unstructured = jax.random.normal(
        k_q, (heads, nb_features // dim_head, dim_head, dim_head), jnp.float32)
    qb, _ = jnp.linalg.qr(unstructured)
    q_t = jnp.transpose(qb, (0, 2, 1, 3)).reshape(heads, dim_head, nb_features)
    g_t = jax.random.normal(k_g, (heads, dim_head, nb_features), jnp.float32)

    out_t = jax.block_until_ready(_scale_projection_fused(q_t, g_t))

    mult_ref = jnp.sqrt(jnp.sum(g_t * g_t, axis=1, keepdims=True))   # (H, 1, R)
    ref = mult_ref * q_t
    assert out_t.shape == (heads, dim_head, nb_features)
    assert bool(jnp.allclose(out_t, ref, atol=1e-5, rtol=1e-5))
    # Sanity: multipliers follow chi(dim_head) -> mean near sqrt(dim_head).
    mean_mult = float(jnp.mean(mult_ref))
    assert 0.75 * (dim_head ** 0.5) < mean_mult < 1.25 * (dim_head ** 0.5)

    print("KERNEL_OK")
</pallas_src>

<mosaic_0001>
module attributes {stable_mosaic.version = 11 : i64} {
  func.func @_redraw_scale_kernel(%arg0: i32, %arg1: memref<1x32x128xf32, #tpu.memory_space<vmem>>, %arg2: memref<1x32x128xf32, #tpu.memory_space<vmem>>, %arg3: memref<1x32x128xf32, #tpu.memory_space<vmem>>) attributes {dimension_semantics = [#tpu.dimension_semantics<parallel>], iteration_bounds = array<i64: 2>, scalar_prefetch = 0 : i64, scratch_operands = 0 : i64, tpu.core_type = #tpu.core_type<tc>, window_params = [{transform_indices = @transform_0, window_bounds = array<i64: 1, 32, 128>}, {transform_indices = @transform_1, window_bounds = array<i64: 1, 32, 128>}, {transform_indices = @transform_2, window_bounds = array<i64: 1, 32, 128>}]} {
    %c0 = arith.constant 0 : index
    %c0_0 = arith.constant 0 : index
    %c0_1 = arith.constant 0 : index
    %0 = vector.load %arg2[%c0, %c0_0, %c0_1] : memref<1x32x128xf32, #tpu.memory_space<vmem>>, vector<1x32x128xf32>
    %1 = vector.shape_cast %0 : vector<1x32x128xf32> to vector<32x128xf32>
    %2 = arith.mulf %1, %1 : vector<32x128xf32>
    %cst = arith.constant dense<0.000000e+00> : vector<128xf32>
    %3 = vector.multi_reduction <add>, %2, %cst [0] : vector<32x128xf32> to vector<128xf32>
    %4 = vector.shape_cast %3 : vector<128xf32> to vector<1x128xf32>
    %5 = math.sqrt %4 : vector<1x128xf32>
    %c0_2 = arith.constant 0 : index
    %c0_3 = arith.constant 0 : index
    %c0_4 = arith.constant 0 : index
    %6 = vector.load %arg1[%c0_2, %c0_3, %c0_4] : memref<1x32x128xf32, #tpu.memory_space<vmem>>, vector<1x32x128xf32>
    %7 = vector.shape_cast %6 : vector<1x32x128xf32> to vector<32x128xf32>
    %8 = vector.broadcast %5 : vector<1x128xf32> to vector<32x128xf32>
    %9 = arith.mulf %8, %7 : vector<32x128xf32>
    %c0_5 = arith.constant 0 : index
    %c0_6 = arith.constant 0 : index
    %c0_7 = arith.constant 0 : index
    %10 = vector.load %arg3[%c0_5, %c0_6, %c0_7] : memref<1x32x128xf32, #tpu.memory_space<vmem>>, vector<1x32x128xf32>
    %11 = vector.shape_cast %10 : vector<1x32x128xf32> to vector<32x128xf32>
    %12 = vector.shape_cast %9 : vector<32x128xf32> to vector<1x32x128xf32>
    tpu.vector_store %arg3[%c0_5, %c0_6, %c0_7], %12 {strides = array<i32>} : memref<1x32x128xf32, #tpu.memory_space<vmem>>, vector<1x32x128xf32>,
    return
  }
  func.func @transform_0(%arg0: i32) -> (i32, i32, i32) {
    %c0_i32 = arith.constant 0 : i32
    %c0_i32_0 = arith.constant 0 : i32
    %c0_i32_1 = arith.constant 0 : i32
    return %arg0, %c0_i32, %c0_i32_0 : i32, i32, i32
  }
  func.func @transform_1(%arg0: i32) -> (i32, i32, i32) {
    %c0_i32 = arith.constant 0 : i32
    %c0_i32_0 = arith.constant 0 : i32
    %c0_i32_1 = arith.constant 0 : i32
    return %arg0, %c0_i32, %c0_i32_0 : i32, i32, i32
  }
  func.func @transform_2(%arg0: i32) -> (i32, i32, i32) {
    %c0_i32 = arith.constant 0 : i32
    %c0_i32_0 = arith.constant 0 : i32
    %c0_i32_1 = arith.constant 0 : i32
    return %arg0, %c0_i32, %c0_i32_0 : i32, i32, i32
  }
}

</mosaic_0001>

<llo_original>
// kernel: custom-call.6
$region0: #{custom-call.6}
  %s0 = inlined_call_operand.vmem [shape: f32[2,4,32,32], index: 0, kind: input, shape index: {}]
  %s1 = inlined_call_operand.vmem [shape: f32[2,4,32,32], index: 1, kind: output, shape index: {0}]
  %s2 = inlined_call_operand.vmem [shape: f32[2,4,32], index: 2, kind: output, shape index: {1}]
  %3 = xla_tuple %s1, %s2
  $region1: #{custom-call.6} parent=0
    #allocation0 [shape = 'u8[32768]{0}', space=vmem, size = 0x8000, scoped, tag = 'operand span for operand 0']
    #allocation1 [shape = 'u8[32768]{0}', space=vmem, size = 0x8000, scoped, tag = 'operand span for operand 1']
    #allocation2 [shape = 'u8[4096]{0}', space=vmem, size = 0x1000, scoped, tag = 'operand span for operand 2']
    #allocation3 [shape = 'u8[4096]{0}', space=vmem, size = 0x1000, scoped, tag = 'packed  for operand 2']
    loop: start=0, step=1, limit=10
    $region2: #{custom-call.6} parent=1 // loop_pre_header
      _
    $region3: #{custom-call.6} parent=1 // loop_header
      %s5 = sphi 0, %s9
      %p6 = scmp.ge.s32.totalorder %s5, 10
      %s12 = sphi 0, %s38
      %s13 = sphi 0, %s34
      %s14 = sphi 0, %s30
      %s15 = sphi 0, %s26
      %s16 = sphi 0, %s12
      %s17 = sphi 0, %s13
      %s18 = sphi 0, %s14
      %s19 = sphi 0, %s15
      %s20 = sphi 0, %s16
      %s21 = sphi 0, %s17
      %s22 = sphi 0, %s18
      %s23 = sphi 0, %s19
      %s55 = sphi 0, %s57
      %s58 = sphi 0, %s55
      %s59 = sphi 0, %s58
      %s75 = sphi 0, %s59
    $region4: #{custom-call.6} parent=1 // loop_header_branch
      %8 = sbr.rel (%p6) target = $region8
    $region5: #{custom-call.6} parent=1 // loop_body
      %s10 = ssub.s32 %s5, 1
      %s11 = ssub.s32 %s5, 2
      %s24 = sadd.s32 1, %s15
      %p25 = scmp.ge.s32.totalorder %s24, 1
      %s26 = scalar_select %p25, 0, %s24
      %s27 = sadd.s32 1, %s14
      %s28 = scalar_select %p25, %s27, %s14
      %p29 = scmp.ge.s32.totalorder %s28, 1
      %s30 = scalar_select %p29, 0, %s28
      %s31 = sadd.s32 1, %s13
      %s32 = scalar_select %p29, %s31, %s13
      %p33 = scmp.ge.s32.totalorder %s32, 4
      %s34 = scalar_select %p33, 0, %s32
      %s35 = sadd.s32 1, %s12
      %s36 = scalar_select %p33, %s35, %s12
      %p37 = scmp.ge.s32.totalorder %s36, 2
      %s38 = scalar_select %p37, 0, %s36
      %p39 = scmp.lt.s32.totalorder %s13, 0
      %s40 = ssub.s32 0, %s13
      %s41 = scalar_select %p39, %s40, %s13
      %s42 = sshrl.u32 %s41, 3
      %s43 = ssub.s32 0, %s42
      %s44 = scalar_select %p39, %s43, %s42
      %p45 = scmp.lt.s32.totalorder %s34, 0
      %s46 = ssub.s32 0, %s34
      %s47 = scalar_select %p45, %s46, %s34
      %s48 = sshrl.u32 %s47, 3
      %s49 = ssub.s32 0, %s48
      %s50 = scalar_select %p45, %s49, %s48
      %s51 = ssub.s32 %s12, %s38
      %s52 = ssub.s32 %s44, %s50
      %s53 = sor.u32 %s51, %s52
      %p54 = scmp.eq.s32.totalorder %s53, 0
      %s56 = sadd.s32 %s55, 1
      %s57 = scalar_select %p54, %s55, %s56
      %p60 = pneg %p54
      %p61 = scmp.eq.s32.totalorder %s5, 7
      %p62 = por %p60, %p61
      %p63 = scmp.ne.s32.totalorder %s55, %s58
      %p64 = scmp.eq.s32.totalorder %s5, 0
      %p65 = por %p63, %p64
      %p66 = scmp.ne.s32.totalorder %s55, %s58
      %p67 = scmp.eq.s32.totalorder %s10, 7
      %p68 = por %p66, %p67
      %p69 = scmp.ne.s32.totalorder %s58, %s59
      %p70 = scmp.eq.s32.totalorder %s10, 0
      %p71 = por %p69, %p70
      %p72 = scmp.ne.s32.totalorder %s58, %s59
      %p73 = scmp.eq.s32.totalorder %s11, 7
      %p74 = por %p72, %p73
      %p76 = scmp.ne.s32.totalorder %s59, %s75
      %p77 = scmp.eq.s32.totalorder %s11, 0
      %p78 = por %p76, %p77
      %p79 = scmp.le.s32.totalorder 1, %s5
      %p80 = scmp.lt.s32.totalorder %s5, 9
      %p81 = pnand %p79, %p80
      %p82 = pneg %p81
      // Predicated region
      $region9: #{custom-call.6} parent=5 // pred_check
        _
      $region10: #{custom-call.6} parent=5 // pred_check_branch
        %84 = sbr.rel (%p81) target = $region12
      $region11: #{custom-call.6} parent=5 // pred_region
        %s85 = ssub.s32 %s5, 1
      $region12: #{custom-call.6} parent=5 // pred_fallthru
        _
      %p86 = scmp.lt.s32.totalorder %s5, 8
      // Predicated region
      $region13: #{custom-call.6} parent=5 // pred_check
        %p87 = pneg %p86
      $region14: #{custom-call.6} parent=5 // pred_check_branch
        %89 = sbr.rel (%p87) target = $region16
      $region15: #{custom-call.6} parent=5 // pred_region
        %s90 = sand.u32 %s5, 1
        %s91 = sand.u32 %s5, 1
        %s92 = smul.addr %s91, 32
        %s93 = scalar_lea.vmem [#allocation0], %s92
        %s94 = smul.u32 4, %s14
        %s95 = sadd.s32 %s15, %s94
        %s96 = smul.addr %s13, 4
        %s97 = sadd.s32 %s95, %s96
        %s98 = smul.addr %s12, 16
        %s99 = sadd.s32 %s97, %s98
        %s100 = smul.addr %s99, 8
        %s101 = scalar_lea.vmem %s0, %s100
        // Predicated region
        $region17: #{custom-call.6} parent=15 // pred_check
          _
        $region18: #{custom-call.6} parent=15 // pred_check_branch
          %103 = sbr.rel (0) target = $region20
        $region19: #{custom-call.6} parent=15 // pred_region
          // Predicated region
          $region21: #{custom-call.6} parent=19 // pred_check
            _
          $region22: #{custom-call.6} parent=19 // pred_check_branch
            %105 = sbr.rel (0) target = $region24
          $region23: #{custom-call.6} parent=19 // pred_region
            // Predicated region
            $region36: #{custom-call.6} parent=23 // pred_check
              _
            $region37: #{custom-call.6} parent=23 // pred_check_branch
              %126 = sbr.rel (0) target = $region39
            $region38: #{custom-call.6} parent=23 // pred_region
              loop: start=0, step=1, limit=1
              $region40: #{custom-call.6} parent=38 // loop_pre_header
                _
              $region41: #{custom-call.6} parent=38 // loop_header
                %s128 = sphi 0, %s132
                %p129 = scmp.ge.s32.totalorder %s128, 1
                %s133 = sphi %s101, %s101
                %s134 = sphi %s93, %s93
              $region42: #{custom-call.6} parent=38 // loop_header_branch
                %131 = sbr.rel (%p129) target = $region46
              $region43: #{custom-call.6} parent=38 // loop_body
                %v135 = vld [vmem:[%s133] sm:$0xff]
                %136 = vst [vmem:[%s134] sm:$0xff] %v135
                %v137 = vld [vmem:[%s133 + $0x8] sm:$0xff]
                %138 = vst [vmem:[%s134 + $0x8] sm:$0xff] %v137
                %v139 = vld [vmem:[%s133 + $0x10] sm:$0xff]
                %140 = vst [vmem:[%s134 + $0x10] sm:$0xff] %v139
                %v141 = vld [vmem:[%s133 + $0x18] sm:$0xff]
                %142 = vst [vmem:[%s134 + $0x18] sm:$0xff] %v141
              $region44: #{custom-call.6} parent=38 // loop_footer
                %s132 = sadd.s32 1, %s128
              $region45: #{custom-call.6} parent=38 // loop_footer_branch
                %127 = sbr.rel target = $region41
              $region46: #{custom-call.6} parent=38 // loop_exit
                _
            $region39: #{custom-call.6} parent=23 // pred_fallthru
              _
            // Predicated region
            $region47: #{custom-call.6} parent=23 // pred_check
              _
            $region48: #{custom-call.6} parent=23 // pred_check_branch
              %144 = sbr.rel target = $region50
            $region49: #{custom-call.6} parent=23 // pred_region
              _
            $region50: #{custom-call.6} parent=23 // pred_fallthru
              _
          $region24: #{custom-call.6} parent=19 // pred_fallthru
            _
          // Predicated region
          $region25: #{custom-call.6} parent=19 // pred_check
            _
          $region26: #{custom-call.6} parent=19 // pred_check_branch
            %107 = sbr.rel target = $region28
          $region27: #{custom-call.6} parent=19 // pred_region
            loop: start=0, step=1, limit=1
            $region29: #{custom-call.6} parent=27 // loop_pre_header
              _
            $region30: #{custom-call.6} parent=27 // loop_header
              %s110 = sphi 0, %s114
              %p111 = scmp.ge.s32.totalorder %s110, 1
              %s115 = sphi %s101, %s101
              %s116 = sphi %s93, %s93
            $region31: #{custom-call.6} parent=27 // loop_header_branch
              %113 = sbr.rel (%p111) target = $region35
            $region32: #{custom-call.6} parent=27 // loop_body
              %v117 = vld [vmem:[%s115] sm:$0xff]
              %118 = vst [vmem:[%s116] sm:$0xff] %v117
              %v119 = vld [vmem:[%s115 + $0x8] sm:$0xff]
              %120 = vst [vmem:[%s116 + $0x8] sm:$0xff] %v119
              %v121 = vld [vmem:[%s115 + $0x10] sm:$0xff]
              %122 = vst [vmem:[%s116 + $0x10] sm:$0xff] %v121
              %v123 = vld [vmem:[%s115 + $0x18] sm:$0xff]
              %124 = vst [vmem:[%s116 + $0x18] sm:$0xff] %v123
            $region33: #{custom-call.6} parent=27 // loop_footer
              %s114 = sadd.s32 1, %s110
            $region34: #{custom-call.6} parent=27 // loop_footer_branch
              %109 = sbr.rel target = $region30
            $region35: #{custom-call.6} parent=27 // loop_exit
              _
          $region28: #{custom-call.6} parent=19 // pred_fallthru
            _
        $region20: #{custom-call.6} parent=15 // pred_fallthru
          _
        %145 = vnop
      $region16: #{custom-call.6} parent=5 // pred_fallthru
        _
      %p146 = scmp.le.s32.totalorder 1, %s5
      %p147 = scmp.lt.s32.totalorder %s5, 9
      %p148 = pnand %p146, %p147
      %p149 = pneg %p148
      // Predicated region
      $region51: #{custom-call.6} parent=5 // pred_check
        _
      $region52: #{custom-call.6} parent=5 // pred_check_branch
        %151 = sbr.rel (%p148) target = $region54
      $region53: #{custom-call.6} parent=5 // pred_region
        #allocation4 [shape = 'f32[32,128]{1,0}', space=vmem, size = 0x4000, scoped, tag = 'scratch for Householder reflectors']
        %s152 = ssub.s32 %s5, 1
        %s153 = sand.u32 %s10, 1
        %s154 = sand.u32 %s10, 1
        %s155 = smul.addr %s154, 32
        %s156 = scalar_lea.vmem [#allocation0], %s155
        %s157 = sand.u32 %s10, 1
        %s158 = sand.u32 %s10, 1
        %s159 = smul.addr %s158, 32
        %s160 = scalar_lea.vmem [#allocation0], %s159
        %s161 = sand.u32 %s10, 1
        %s162 = sand.u32 %s10, 1
        %s163 = smul.addr %s162, 32
        %s164 = scalar_lea.vmem [#allocation1], %s163
        %p165 = pneg %p71
        %p166 = pneg %p68
        %s167 = sand.u32 %s58, 1
        %s168 = sand.u32 %s58, 1
        %s169 = smul.addr %s168, 4
        %s170 = scalar_lea.vmem [#allocation3], %s169
        %s171 = smul.u32 4, %s18
        %s172 = smul.u32 4, %s18
        %p173 = scmp.lt.s32.totalorder %s17, 0
        %s174 = ssub.s32 0, %s17
        %s175 = scalar_select %p173, %s174, %s17
        %s176 = sshrl.u32 %s175, 3
        %s177 = ssub.s32 0, %s176
        %s178 = scalar_select %p173, %s177, %s176
        %s179 = sand.u32 %s17, 7
        %s180 = scalar_lea.vmem [#allocation2], %s179
        %v181 = vld [vmem:[%s156] sm:$0xff]
        %182 = vst [vmem:[%s164] sm:$0xff] %v181
        %s183 = scalar_lea.vmem %s164, 8 [#allocation1]
        %s184 = scalar_lea.vmem %s156, 8 [#allocation0]
        %v185 = vld [vmem:[%s184] sm:$0xff]
        %186 = vst [vmem:[%s183] sm:$0xff] %v185
        %s187 = scalar_lea.vmem %s164, 16 [#allocation1]
        %s188 = scalar_lea.vmem %s156, 16 [#allocation0]
        %v189 = vld [vmem:[%s188] sm:$0xff]
        %190 = vst [vmem:[%s187] sm:$0xff] %v189
        %s191 = scalar_lea.vmem %s164, 24 [#allocation1]
        %s192 = scalar_lea.vmem %s156, 24 [#allocation0]
        %v193 = vld [vmem:[%s192] sm:$0xff]
        %194 = vst [vmem:[%s191] sm:$0xff] %v193
        %195 = vst [vmem:[%s180] sm:$0x1] 0.0
        loop: start=0, step=1, limit=32
        $region55: #{custom-call.6} parent=53 // loop_pre_header
          _
        $region56: #{custom-call.6} parent=53 // loop_header
          %s197 = sphi 0, %s201
          %p198 = scmp.ge.s32.totalorder %s197, 32
        $region57: #{custom-call.6} parent=53 // loop_header_branch
          %200 = sbr.rel (%p198) target = $region61
        $region58: #{custom-call.6} parent=53 // loop_body
          %v202 = vld [vmem:[%s164] sm:$0xff]
          %v203 = vlaneseq
          %v204 = vshrl.u32 %v203, 7
          %v206 = vstv %s197
          %vm207 = vcmp.gt.s32.totalorder %v204, %v206
          %v208 = vsel %vm207, %v202, 0.0
          %v209 = vmul.f32 %v208, %v208
          %s210 = scalar_lea.vmem %s164, 8 [#allocation1]
          %v211 = vld [vmem:[%s210] sm:$0xff]
          %v212 = vlaneseq
          %v213 = vshrl.u32 %v212, 7
          %v214 = vadd.s32 %v213, 8
          %v215 = vstv %s197
          %vm216 = vcmp.gt.s32.totalorder %v214, %v215
          %v217 = vsel %vm216, %v211, 0.0
          %v218 = vmul.f32 %v217, %v217
          %v219 = vadd.f32 %v209, %v218
          %s220 = scalar_lea.vmem %s164, 16 [#allocation1]
          %v221 = vld [vmem:[%s220] sm:$0xff]
          %v222 = vlaneseq
          %v223 = vshrl.u32 %v222, 7
          %v224 = vadd.s32 %v223, 16
          %v225 = vstv %s197
          %vm226 = vcmp.gt.s32.totalorder %v224, %v225
          %v227 = vsel %vm226, %v221, 0.0
          %v228 = vmul.f32 %v227, %v227
          %v229 = vadd.f32 %v219, %v228
          %s230 = scalar_lea.vmem %s164, 24 [#allocation1]
          %v231 = vld [vmem:[%s230] sm:$0xff]
          %v232 = vlaneseq
          %v233 = vshrl.u32 %v232, 7
          %v234 = vadd.s32 %v233, 24
          %v235 = vstv %s197
          %vm236 = vcmp.gt.s32.totalorder %v234, %v235
          %vm237 = vcmp.lt.s32.totalorder %v234, 32
          %vm238 = vmand %vm236, %vm237
          %v239 = vsel %vm238, %v231, 0.0
          %v240 = vmul.f32 %v239, %v239
          %v241 = vadd.f32 %v229, %v240
          %v242 = vrot.slane %v241, 4
          %v243 = vadd.f32 %v241, %v242
          %v244 = vrot.slane %v243, 2
          %v245 = vadd.f32 %v243, %v244
          %v246 = vrot.slane %v245, 1
          %v247 = vadd.f32 %v245, %v246
          %v248 = vrsqrt.pop %v247
          %v249 = vmul.f32 %v247, %v248
          %vm250 = vcmp.eq.f32.partialorder %v247, inf
          %v251 = vsel %vm250, %v247, %v249
          %vm252 = vcmp.eq.f32.partialorder %v247, 0.0
          %v253 = vand.u32 %v247, 2147483648
          %v254 = vsel %vm252, %v253, %v251
          %vm255 = vcmp.eq.f32.partialorder %v247, 0.0
          %s256 = sshrl.u32 %s197, 3
          %s257 = sand.u32 %s197, 7
          %s258 = smul.addr %s256, 8
          %s259 = sadd.s32 %s257, %s258
          %s260 = scalar_lea.vmem %s164, %s259 [#allocation1]
          %v261 = vld [vmem:[%s260] ss:$0 sm:$0xff]
          %v262 = vand.u32 2147483647, %v261
          %v263 = vmax.f32 %v262, 0.0
          %v264 = vand.u32 2147483647, %v254
          %v265 = vmax.f32 %v263, %v264
          %v266 = vrcp.pop %v265
          %v267 = vmul.f32 %v262, %v266
          %v268 = vmul.f32 %v267, %v267
          %v269 = vrcp.pop %v265
          %v270 = vmul.f32 0.0, %v269
          %v271 = vmul.f32 %v270, %v270
          %v272 = vadd.f32 %v268, %v271
          %v273 = vrcp.pop %v265
          %v274 = vmul.f32 %v264, %v273
          %v275 = vmul.f32 %v274, %v274
          %v276 = vadd.f32 %v272, %v275
          %vm277 = vcmp.eq.f32.partialorder %v265, 0.0
          %v278 = vrsqrt.pop %v276
          %v279 = vmul.f32 %v276, %v278
          %vm280 = vcmp.eq.f32.partialorder %v276, inf
          %v281 = vsel %vm280, %v276, %v279
          %vm282 = vcmp.eq.f32.partialorder %v276, 0.0
          %v283 = vand.u32 %v276, 2147483648
          %v284 = vsel %vm282, %v283, %v281
          %v285 = vmul.f32 %v265, %v284
          %v286 = vsel %vm277, 0.0, %v285
          %vm287 = vcmp.lt.f32.partialorder %v261, 0.0
          %v288 = vxor.u32 %v286, 2147483648
          %v289 = vsel %vm287, %v286, %v288
          %v290 = vsub.f32 %v289, %v261
          %v291 = vrcp.pop %v289
          %v292 = vmul.f32 %v290, %v291
          %v293 = vsel %vm255, %v261, %v289
          %v294 = vsel %vm255, 0.0, %v292
          %v295 = vsub.f32 %v261, %v293
          %s296 = smov %s164
          %v297 = vlaneseq
          %v298 = vshrl.u32 %v297, 7
          %v299 = vmov %v298
          %v300 = vld [vmem:[%s296] sm:$0xff]
          %v302 = vstv %s197
          %vm303 = vcmp.gt.s32.totalorder %v299, %v302
          %v304 = vsel %vm303, %v300, 0.0
          %v305 = vrcp.pop %v295
          %v306 = vmul.f32 %v304, %v305
          %v307 = vsel %vm255, 0.0, %v306
          %v308 = vstv %s197
          %v309 = vlaneseq
          %v310 = vand.u32 %v309, 127
          %vm311 = vcmp.eq.s32.totalorder %v310, %v308
          %v312 = vsel %vm311, %v307, 0.0
          %313 = vadd.xlane.f32.xlu0 %v312
          %v314 = vpop.xlane.xlu0 %313
          %315 = vst [vmem:[#allocation4] sm:$0xff] %v314
          %s316 = scalar_lea.vmem %s296, 8
          %v317 = vld [vmem:[%s316] sm:$0xff]
          %v318 = vadd.s32 %v299, 8
          %v319 = vstv %s197
          %vm320 = vcmp.gt.s32.totalorder %v318, %v319
          %v321 = vsel %vm320, %v317, 0.0
          %v322 = vrcp.pop %v295
          %v323 = vmul.f32 %v321, %v322
          %v324 = vsel %vm255, 0.0, %v323
          %v325 = vstv %s197
          %v326 = vlaneseq
          %v327 = vand.u32 %v326, 127
          %vm328 = vcmp.eq.s32.totalorder %v327, %v325
          %v329 = vsel %vm328, %v324, 0.0
          %330 = vadd.xlane.f32.xlu0 %v329
          %v331 = vpop.xlane.xlu0 %330
          %s332 = scalar_lea.vmem [#allocation4], 8
          %333 = vst [vmem:[%s332] sm:$0xff] %v331
          %s334 = scalar_lea.vmem %s296, 16
          %v335 = vld [vmem:[%s334] sm:$0xff]
          %v336 = vadd.s32 %v299, 16
          %v337 = vstv %s197
          %vm338 = vcmp.gt.s32.totalorder %v336, %v337
          %v339 = vsel %vm338, %v335, 0.0
          %v340 = vrcp.pop %v295
          %v341 = vmul.f32 %v339, %v340
          %v342 = vsel %vm255, 0.0, %v341
          %v343 = vstv %s197
          %v344 = vlaneseq
          %v345 = vand.u32 %v344, 127
          %vm346 = vcmp.eq.s32.totalorder %v345, %v343
          %v347 = vsel %vm346, %v342, 0.0
          %348 = vadd.xlane.f32.xlu0 %v347
          %v349 = vpop.xlane.xlu0 %348
          %s350 = scalar_lea.vmem [#allocation4], 16
          %351 = vst [vmem:[%s350] sm:$0xff] %v349
          %s352 = scalar_lea.vmem %s296, 24
          %v353 = vld [vmem:[%s352] sm:$0xff]
          %v354 = vadd.s32 %v299, 24
          %v355 = vstv %s197
          %vm356 = vcmp.gt.s32.totalorder %v354, %v355
          %vm357 = vcmp.lt.s32.totalorder %v354, 32
          %vm358 = vmand %vm356, %vm357
          %v359 = vsel %vm358, %v353, 0.0
          %v360 = vrcp.pop %v295
          %v361 = vmul.f32 %v359, %v360
          %v362 = vsel %vm255, 0.0, %v361
          %v363 = vstv %s197
          %v364 = vlaneseq
          %v365 = vand.u32 %v364, 127
          %vm366 = vcmp.eq.s32.totalorder %v365, %v363
          %v367 = vsel %vm366, %v362, 0.0
          %368 = vadd.xlane.f32.xlu0 %v367
          %v369 = vpop.xlane.xlu0 %368
          %s370 = scalar_lea.vmem [#allocation4], 24
          %371 = vst [vmem:[%s370] sm:$0xff] %v369
          %s372 = scalar_lea.vmem [#allocation4], %s197
          %373 = vst [vmem:[%s372] sm:$0x1] 1.0
          %v374 = vstv %s197
          %v375 = vlaneseq
          %v376 = vand.u32 %v375, 127
          %vm377 = vcmp.eq.s32.totalorder %v376, %v374
          %v378 = vsel %vm377, %v294, 0.0
          %379 = vadd.xlane.f32.xlu0 %v378
          %v380 = vpop.xlane.xlu0 %379
          %v381 = vstv %s197
          %v382 = vlaneseq
          %v383 = vand.u32 %v382, 127
          %vm384 = vcmp.eq.s32.totalorder %v383, %v381
          %v385 = vld [vmem:[%s180] ss:$0 sm:$0xff]
          %v386 = vsel %vm384, %v380, %v385
          %387 = vst [vmem:[%s180] sm:$0x1] %v386
          %s388 = smov %s164
          %s389 = smov [#allocation4]
          %v390 = vlaneseq
          %v391 = vshrl.u32 %v390, 7
          %v392 = vmov %v391
          %v394 = vld [vmem:[%s389] sm:$0xff]
          %v395 = vld [vmem:[%s388] sm:$0xff]
          %v396 = vmul.f32 %v394, %v395
          %v397 = vadd.s32 %v392, 8
          %s398 = scalar_lea.vmem %s389, 8
          %v399 = vld [vmem:[%s398] sm:$0xff]
          %s400 = scalar_lea.vmem %s388, 8
          %v401 = vld [vmem:[%s400] sm:$0xff]
          %v402 = vmul.f32 %v399, %v401
          %v403 = vadd.f32 %v396, %v402
          %v404 = vadd.s32 %v392, 16
          %s405 = scalar_lea.vmem %s389, 16
          %v406 = vld [vmem:[%s405] sm:$0xff]
          %s407 = scalar_lea.vmem %s388, 16
          %v408 = vld [vmem:[%s407] sm:$0xff]
          %v409 = vmul.f32 %v406, %v408
          %v410 = vadd.f32 %v403, %v409
          %v411 = vadd.s32 %v392, 24
          %s412 = scalar_lea.vmem %s389, 24
          %v413 = vld [vmem:[%s412] sm:$0xff]
          %s414 = scalar_lea.vmem %s388, 24
          %v415 = vld [vmem:[%s414] sm:$0xff]
          %v416 = vmul.f32 %v413, %v415
          %vm417 = vcmp.lt.s32.totalorder %v411, 32
          %v418 = vsel %vm417, %v416, 0.0
          %v419 = vadd.f32 %v410, %v418
          %v420 = vrot.slane %v419, 4
          %v421 = vadd.f32 %v419, %v420
          %v422 = vrot.slane %v421, 2
          %v423 = vadd.f32 %v421, %v422
          %v424 = vrot.slane %v423, 1
          %v425 = vadd.f32 %v423, %v424
          %s426 = smov %s388
          %s427 = smov %s389
          %v428 = vlaneseq
          %v429 = vshrl.u32 %v428, 7
          %v430 = vmov %v429
          %v431 = vmul.f32 %v425, %v380
          %v433 = vlaneseq
          %v434 = vand.u32 %v433, 127
          %v435 = vld [vmem:[%s427] sm:$0xff]
          %v436 = vmul.f32 %v435, %v431
          %v437 = vld [vmem:[%s426] sm:$0xff]
          %v438 = vstv %s197
          %vm439 = vcmp.gt.s32.totalorder %v434, %v438
          %v440 = vsub.f32 %v437, %v436
          %v441 = vsel %vm439, %v440, %v437
          %v442 = vstv %s197
          %v443 = vlaneseq
          %v444 = vand.u32 %v443, 127
          %vm445 = vcmp.eq.s32.totalorder %v444, %v442
          %v446 = vstv %s197
          %vm447 = vcmp.ge.s32.totalorder %v430, %v446
          %vm448 = vmand %vm445, %vm447
          %v449 = vsel %vm448, %v435, %v441
          %450 = vst [vmem:[%s426] sm:$0xff] %v449
          %v451 = vadd.s32 %v430, 8
          %v452 = vlaneseq
          %v453 = vand.u32 %v452, 127
          %s454 = scalar_lea.vmem %s427, 8
          %v455 = vld [vmem:[%s454] sm:$0xff]
          %v456 = vmul.f32 %v455, %v431
          %s457 = scalar_lea.vmem %s426, 8
          %v458 = vld [vmem:[%s457] sm:$0xff]
          %v459 = vstv %s197
          %vm460 = vcmp.gt.s32.totalorder %v453, %v459
          %v461 = vsub.f32 %v458, %v456
          %v462 = vsel %vm460, %v461, %v458
          %v463 = vstv %s197
          %v464 = vlaneseq
          %v465 = vand.u32 %v464, 127
          %vm466 = vcmp.eq.s32.totalorder %v465, %v463
          %v467 = vstv %s197
          %vm468 = vcmp.ge.s32.totalorder %v451, %v467
          %vm469 = vmand %vm466, %vm468
          %v470 = vsel %vm469, %v455, %v462
          %471 = vst [vmem:[%s457] sm:$0xff] %v470
          %v472 = vadd.s32 %v430, 16
          %v473 = vlaneseq
          %v474 = vand.u32 %v473, 127
          %s475 = scalar_lea.vmem %s427, 16
          %v476 = vld [vmem:[%s475] sm:$0xff]
          %v477 = vmul.f32 %v476, %v431
          %s478 = scalar_lea.vmem %s426, 16
          %v479 = vld [vmem:[%s478] sm:$0xff]
          %v480 = vstv %s197
          %vm481 = vcmp.gt.s32.totalorder %v474, %v480
          %v482 = vsub.f32 %v479, %v477
          %v483 = vsel %vm481, %v482, %v479
          %v484 = vstv %s197
          %v485 = vlaneseq
          %v486 = vand.u32 %v485, 127
          %vm487 = vcmp.eq.s32.totalorder %v486, %v484
          %v488 = vstv %s197
          %vm489 = vcmp.ge.s32.totalorder %v472, %v488
          %vm490 = vmand %vm487, %vm489
          %v491 = vsel %vm490, %v476, %v483
          %492 = vst [vmem:[%s478] sm:$0xff] %v491
          %v493 = vadd.s32 %v430, 24
          %v494 = vlaneseq
          %v495 = vand.u32 %v494, 127
          %s496 = scalar_lea.vmem %s427, 24
          %v497 = vld [vmem:[%s496] sm:$0xff]
          %v498 = vmul.f32 %v497, %v431
          %s499 = scalar_lea.vmem %s426, 24
          %v500 = vld [vmem:[%s499] sm:$0xff]
          %v501 = vstv %s197
          %vm502 = vcmp.gt.s32.totalorder %v495, %v501
          %v503 = vsub.f32 %v500, %v498
          %v504 = vsel %vm502, %v503, %v500
          %v505 = vstv %s197
          %v506 = vlaneseq
          %v507 = vand.u32 %v506, 127
          %vm508 = vcmp.eq.s32.totalorder %v507, %v505
          %v509 = vstv %s197
          %vm510 = vcmp.ge.s32.totalorder %v493, %v509
          %vm511 = vmand %vm508, %vm510
          %v512 = vsel %vm511, %v497, %v504
          %513 = vst [vmem:[%s499] sm:$0xff] %v512
          %s514 = scalar_lea.vmem %s426, %s197
          %v515 = vld [vmem:[%s514] ss:$0 sm:$0xff]
          %v516 = vstv %s197
          %v517 = vlaneseq
          %v518 = vand.u32 %v517, 127
          %vm519 = vcmp.eq.s32.totalorder %v518, %v516
          %v520 = vsel %vm519, %v293, %v515
          %521 = vst [vmem:[%s514] sm:$0x1] %v520
        $region59: #{custom-call.6} parent=53 // loop_footer
          %s201 = sadd.s32 1, %s197
        $region60: #{custom-call.6} parent=53 // loop_footer_branch
          %196 = sbr.rel target = $region56
        $region61: #{custom-call.6} parent=53 // loop_exit
          _
        %s523 = sshllo.u32 0, 4
        %v525 = vld [vmem:[#allocation2] sm:%s523]
        %s526 = sshllo.u32 0, 4
        %527 = vst [vmem:[%s170] sm:%s526] %v525
        %s528 = sand.u32 %s10, 1
        %s529 = sand.u32 %s10, 1
        %s530 = smul.addr %s529, 32
        %s531 = scalar_lea.vmem [#allocation1], %s530
        %s532 = sand.u32 %s58, 1
        %s533 = sand.u32 %s58, 1
        %s534 = smul.addr %s533, 4
        %s535 = scalar_lea.vmem [#allocation3], %s534
        %s536 = smul.u32 4, %s18
        %s537 = sadd.s32 %s19, %s536
        %s538 = smul.addr %s17, 4
        %s539 = sadd.s32 %s537, %s538
        %s540 = smul.addr %s16, 16
        %s541 = sadd.s32 %s539, %s540
        %s542 = smul.addr %s541, 8
        %s543 = scalar_lea.vmem %s1, %s542
        // Predicated region
        $region62: #{custom-call.6} parent=53 // pred_check
          _
        $region63: #{custom-call.6} parent=53 // pred_check_branch
          %545 = sbr.rel (0) target = $region65
        $region64: #{custom-call.6} parent=53 // pred_region
          // Predicated region
          $region66: #{custom-call.6} parent=64 // pred_check
            _
          $region67: #{custom-call.6} parent=64 // pred_check_branch
            %547 = sbr.rel (0) target = $region69
          $region68: #{custom-call.6} parent=64 // pred_region
            // Predicated region
            $region81: #{custom-call.6} parent=68 // pred_check
              _
            $region82: #{custom-call.6} parent=68 // pred_check_branch
              %568 = sbr.rel (0) target = $region84
            $region83: #{custom-call.6} parent=68 // pred_region
              loop: start=0, step=1, limit=1
              $region85: #{custom-call.6} parent=83 // loop_pre_header
                _
              $region86: #{custom-call.6} parent=83 // loop_header
                %s570 = sphi 0, %s574
                %p571 = scmp.ge.s32.totalorder %s570, 1
                %s575 = sphi %s531, %s531
                %s576 = sphi %s543, %s543
              $region87: #{custom-call.6} parent=83 // loop_header_branch
                %573 = sbr.rel (%p571) target = $region91
              $region88: #{custom-call.6} parent=83 // loop_body
                %v577 = vld [vmem:[%s575] sm:$0xff]
                %578 = vst [vmem:[%s576] sm:$0xff] %v577
                %v579 = vld [vmem:[%s575 + $0x8] sm:$0xff]
                %580 = vst [vmem:[%s576 + $0x8] sm:$0xff] %v579
                %v581 = vld [vmem:[%s575 + $0x10] sm:$0xff]
                %582 = vst [vmem:[%s576 + $0x10] sm:$0xff] %v581
                %v583 = vld [vmem:[%s575 + $0x18] sm:$0xff]
                %584 = vst [vmem:[%s576 + $0x18] sm:$0xff] %v583
              $region89: #{custom-call.6} parent=83 // loop_footer
                %s574 = sadd.s32 1, %s570
              $region90: #{custom-call.6} parent=83 // loop_footer_branch
                %569 = sbr.rel target = $region86
              $region91: #{custom-call.6} parent=83 // loop_exit
                _
            $region84: #{custom-call.6} parent=68 // pred_fallthru
              _
            // Predicated region
            $region92: #{custom-call.6} parent=68 // pred_check
              _
            $region93: #{custom-call.6} parent=68 // pred_check_branch
              %586 = sbr.rel target = $region95
            $region94: #{custom-call.6} parent=68 // pred_region
              _
            $region95: #{custom-call.6} parent=68 // pred_fallthru
              _
          $region69: #{custom-call.6} parent=64 // pred_fallthru
            _
          // Predicated region
          $region70: #{custom-call.6} parent=64 // pred_check
            _
          $region71: #{custom-call.6} parent=64 // pred_check_branch
            %549 = sbr.rel target = $region73
          $region72: #{custom-call.6} parent=64 // pred_region
            loop: start=0, step=1, limit=1
            $region74: #{custom-call.6} parent=72 // loop_pre_header
              _
            $region75: #{custom-call.6} parent=72 // loop_header
              %s552 = sphi 0, %s556
              %p553 = scmp.ge.s32.totalorder %s552, 1
              %s557 = sphi %s531, %s531
              %s558 = sphi %s543, %s543
            $region76: #{custom-call.6} parent=72 // loop_header_branch
              %555 = sbr.rel (%p553) target = $region80
            $region77: #{custom-call.6} parent=72 // loop_body
              %v559 = vld [vmem:[%s557] sm:$0xff]
              %560 = vst [vmem:[%s558] sm:$0xff] %v559
              %v561 = vld [vmem:[%s557 + $0x8] sm:$0xff]
              %562 = vst [vmem:[%s558 + $0x8] sm:$0xff] %v561
              %v563 = vld [vmem:[%s557 + $0x10] sm:$0xff]
              %564 = vst [vmem:[%s558 + $0x10] sm:$0xff] %v563
              %v565 = vld [vmem:[%s557 + $0x18] sm:$0xff]
              %566 = vst [vmem:[%s558 + $0x18] sm:$0xff] %v565
            $region78: #{custom-call.6} parent=72 // loop_footer
              %s556 = sadd.s32 1, %s552
            $region79: #{custom-call.6} parent=72 // loop_footer_branch
              %551 = sbr.rel target = $region75
            $region80: #{custom-call.6} parent=72 // loop_exit
              _
          $region73: #{custom-call.6} parent=64 // pred_fallthru
            _
        $region65: #{custom-call.6} parent=53 // pred_fallthru
          _
        %587 = vnop
        // Predicated region
        $region96: #{custom-call.6} parent=53 // pred_check
          %p588 = pneg %p68
        $region97: #{custom-call.6} parent=53 // pred_check_branch
          %590 = sbr.rel (%p588) target = $region99
        $region98: #{custom-call.6} parent=53 // pred_region
          %p591 = scmp.lt.s32.totalorder %s17, 0
          %s592 = ssub.s32 0, %s17
          %s593 = scalar_select %p591, %s592, %s17
          %s594 = sshrl.u32 %s593, 3
          %s595 = ssub.s32 0, %s594
          %s596 = scalar_select %p591, %s595, %s594
          %s597 = sadd.s32 %s596, %s16
          %s598 = smul.addr %s597, 4
          %s599 = scalar_lea.vmem %s2, %s598
          // Predicated region
          $region100: #{custom-call.6} parent=98 // pred_check
            _
          $region101: #{custom-call.6} parent=98 // pred_check_branch
            %601 = sbr.rel (0) target = $region103
          $region102: #{custom-call.6} parent=98 // pred_region
            // Predicated region
            $region104: #{custom-call.6} parent=102 // pred_check
              _
            $region105: #{custom-call.6} parent=102 // pred_check_branch
              %603 = sbr.rel target = $region107
            $region106: #{custom-call.6} parent=102 // pred_region
              // Predicated region
              $region119: #{custom-call.6} parent=106 // pred_check
                _
              $region120: #{custom-call.6} parent=106 // pred_check_branch
                %618 = sbr.rel (0) target = $region122
              $region121: #{custom-call.6} parent=106 // pred_region
                loop: start=0, step=1, limit=1
                $region123: #{custom-call.6} parent=121 // loop_pre_header
                  _
                $region124: #{custom-call.6} parent=121 // loop_header
                  %s621 = sphi 0, %s625
                  %p622 = scmp.ge.s32.totalorder %s621, 1
                  %s626 = sphi %s535, %s535
                  %s627 = sphi %s599, %s599
                $region125: #{custom-call.6} parent=121 // loop_header_branch
                  %624 = sbr.rel (%p622) target = $region129
                $region126: #{custom-call.6} parent=121 // loop_body
                  %v628 = vld [vmem:[%s626] sm:$0xf]
                  %629 = vst [vmem:[%s627] sm:$0xf] %v628
                $region127: #{custom-call.6} parent=121 // loop_footer
                  %s625 = sadd.s32 1, %s621
                $region128: #{custom-call.6} parent=121 // loop_footer_branch
                  %620 = sbr.rel target = $region124
                $region129: #{custom-call.6} parent=121 // loop_exit
                  _
              $region122: #{custom-call.6} parent=106 // pred_fallthru
                _
            $region107: #{custom-call.6} parent=102 // pred_fallthru
              _
            // Predicated region
            $region108: #{custom-call.6} parent=102 // pred_check
              _
            $region109: #{custom-call.6} parent=102 // pred_check_branch
              %605 = sbr.rel (0) target = $region111
            $region110: #{custom-call.6} parent=102 // pred_region
              loop: start=0, step=1, limit=1
              $region112: #{custom-call.6} parent=110 // loop_pre_header
                _
              $region113: #{custom-call.6} parent=110 // loop_header
                %s608 = sphi 0, %s612
                %p609 = scmp.ge.s32.totalorder %s608, 1
                %s613 = sphi %s535, %s535
                %s614 = sphi %s599, %s599
              $region114: #{custom-call.6} parent=110 // loop_header_branch
                %611 = sbr.rel (%p609) target = $region118
              $region115: #{custom-call.6} parent=110 // loop_body
                %v615 = vld [vmem:[%s613] sm:$0xf]
                %616 = vst [vmem:[%s614] sm:$0xf] %v615
              $region116: #{custom-call.6} parent=110 // loop_footer
                %s612 = sadd.s32 1, %s608
              $region117: #{custom-call.6} parent=110 // loop_footer_branch
                %607 = sbr.rel target = $region113
              $region118: #{custom-call.6} parent=110 // loop_exit
                _
            $region111: #{custom-call.6} parent=102 // pred_fallthru
              _
          $region103: #{custom-call.6} parent=98 // pred_fallthru
            _
          %630 = vnop
        $region99: #{custom-call.6} parent=53 // pred_fallthru
          _
      $region54: #{custom-call.6} parent=5 // pred_fallthru
        _
      %p631 = scmp.le.s32.totalorder 2, %s5
      // Predicated region
      $region130: #{custom-call.6} parent=5 // pred_check
        %p632 = pneg %p631
      $region131: #{custom-call.6} parent=5 // pred_check_branch
        %634 = sbr.rel (%p632) target = $region133
      $region132: #{custom-call.6} parent=5 // pred_region
        %s635 = ssub.s32 %s5, 2
        %s636 = sand.u32 %s11, 1
        %s637 = sand.u32 %s11, 1
        %s638 = smul.addr %s637, 32
        %s639 = scalar_lea.vmem [#allocation1], %s638
        // Predicated region
        $region134: #{custom-call.6} parent=132 // pred_check
          %p640 = pneg %p74
        $region135: #{custom-call.6} parent=132 // pred_check_branch
          %642 = sbr.rel (%p640) target = $region137
        $region136: #{custom-call.6} parent=132 // pred_region
          %s643 = sand.u32 %s59, 1
          %s644 = sand.u32 %s59, 1
          %s645 = smul.addr %s644, 4
          %s646 = scalar_lea.vmem [#allocation3], %s645
        $region137: #{custom-call.6} parent=132 // pred_fallthru
          _
      $region133: #{custom-call.6} parent=5 // pred_fallthru
        _
    $region6: #{custom-call.6} parent=1 // loop_footer
      %s9 = sadd.s32 1, %s5
    $region7: #{custom-call.6} parent=1 // loop_footer_branch
      %4 = sbr.rel target = $region3
    $region8: #{custom-call.6} parent=1 // loop_exit
      _

// kernel: custom-call.8
$region0: #{custom-call.8}
  %s0 = inlined_call_operand.vmem [shape: f32[2,4,32,32], index: 0, kind: input, shape index: {}]
  %s1 = inlined_call_operand.vmem [shape: f32[2,4,32,32], index: 1, kind: output, shape index: {}]
  $region1: #{custom-call.8} parent=0
    #allocation0 [shape = 'u8[32768]{0}', space=vmem, size = 0x8000, scoped, tag = 'operand span for operand 0']
    #allocation1 [shape = 'u8[32768]{0}', space=vmem, size = 0x8000, scoped, tag = 'operand span for operand 1']
    loop: start=0, step=1, limit=10
    $region2: #{custom-call.8} parent=1 // loop_pre_header
      _
    $region3: #{custom-call.8} parent=1 // loop_header
      %s3 = sphi 0, %s7
      %p4 = scmp.ge.s32.totalorder %s3, 10
      %s10 = sphi 0, %s22
      %s11 = sphi 0, %s18
      %s12 = sphi 0, %s10
      %s13 = sphi 0, %s11
      %s14 = sphi 0, %s12
      %s15 = sphi 0, %s13
    $region4: #{custom-call.8} parent=1 // loop_header_branch
      %6 = sbr.rel (%p4) target = $region8
    $region5: #{custom-call.8} parent=1 // loop_body
      %s8 = ssub.s32 %s3, 1
      %s9 = ssub.s32 %s3, 2
      %s16 = sadd.s32 1, %s11
      %p17 = scmp.ge.s32.totalorder %s16, 4
      %s18 = scalar_select %p17, 0, %s16
      %s19 = sadd.s32 1, %s10
      %s20 = scalar_select %p17, %s19, %s10
      %p21 = scmp.ge.s32.totalorder %s20, 2
      %s22 = scalar_select %p21, 0, %s20
      %p23 = scmp.le.s32.totalorder 1, %s3
      %p24 = scmp.lt.s32.totalorder %s3, 9
      %p25 = pnand %p23, %p24
      %p26 = pneg %p25
      // Predicated region
      $region9: #{custom-call.8} parent=5 // pred_check
        _
      $region10: #{custom-call.8} parent=5 // pred_check_branch
        %28 = sbr.rel (%p25) target = $region12
      $region11: #{custom-call.8} parent=5 // pred_region
        %s29 = ssub.s32 %s3, 1
      $region12: #{custom-call.8} parent=5 // pred_fallthru
        _
      %p30 = scmp.lt.s32.totalorder %s3, 8
      // Predicated region
      $region13: #{custom-call.8} parent=5 // pred_check
        %p31 = pneg %p30
      $region14: #{custom-call.8} parent=5 // pred_check_branch
        %33 = sbr.rel (%p31) target = $region16
      $region15: #{custom-call.8} parent=5 // pred_region
        %s34 = sand.u32 %s3, 1
        %s35 = sand.u32 %s3, 1
        %s36 = smul.addr %s35, 32
        %s37 = scalar_lea.vmem [#allocation0], %s36
        %s38 = smul.addr %s10, 4
        %s39 = sadd.s32 %s11, %s38
        %s40 = smul.addr %s39, 32
        %s41 = scalar_lea.vmem %s0, %s40
        // Predicated region
        $region17: #{custom-call.8} parent=15 // pred_check
          _
        $region18: #{custom-call.8} parent=15 // pred_check_branch
          %43 = sbr.rel (0) target = $region20
        $region19: #{custom-call.8} parent=15 // pred_region
          // Predicated region
          $region21: #{custom-call.8} parent=19 // pred_check
            _
          $region22: #{custom-call.8} parent=19 // pred_check_branch
            %45 = sbr.rel (0) target = $region24
          $region23: #{custom-call.8} parent=19 // pred_region
            loop: start=0, step=1, limit=1
            $region25: #{custom-call.8} parent=23 // loop_pre_header
              _
            $region26: #{custom-call.8} parent=23 // loop_header
              %s47 = sphi 0, %s51
              %p48 = scmp.ge.s32.totalorder %s47, 1
              %s52 = sphi %s41, %s41
              %s53 = sphi %s37, %s37
            $region27: #{custom-call.8} parent=23 // loop_header_branch
              %50 = sbr.rel (%p48) target = $region31
            $region28: #{custom-call.8} parent=23 // loop_body
              %v54 = vld [vmem:[%s52] sm:$0xff]
              %55 = vst [vmem:[%s53] sm:$0xff] %v54
              %v56 = vld [vmem:[%s52 + $0x8] sm:$0xff]
              %57 = vst [vmem:[%s53 + $0x8] sm:$0xff] %v56
              %v58 = vld [vmem:[%s52 + $0x10] sm:$0xff]
              %59 = vst [vmem:[%s53 + $0x10] sm:$0xff] %v58
              %v60 = vld [vmem:[%s52 + $0x18] sm:$0xff]
              %61 = vst [vmem:[%s53 + $0x18] sm:$0xff] %v60
            $region29: #{custom-call.8} parent=23 // loop_footer
              %s51 = sadd.s32 1, %s47
            $region30: #{custom-call.8} parent=23 // loop_footer_branch
              %46 = sbr.rel target = $region26
            $region31: #{custom-call.8} parent=23 // loop_exit
              _
          $region24: #{custom-call.8} parent=19 // pred_fallthru
            _
          // Predicated region
          $region32: #{custom-call.8} parent=19 // pred_check
            _
          $region33: #{custom-call.8} parent=19 // pred_check_branch
            %63 = sbr.rel target = $region35
          $region34: #{custom-call.8} parent=19 // pred_region
            _
          $region35: #{custom-call.8} parent=19 // pred_fallthru
            _
        $region20: #{custom-call.8} parent=15 // pred_fallthru
          _
        %64 = vnop
      $region16: #{custom-call.8} parent=5 // pred_fallthru
        _
      %p65 = scmp.le.s32.totalorder 1, %s3
      %p66 = scmp.lt.s32.totalorder %s3, 9
      %p67 = pnand %p65, %p66
      %p68 = pneg %p67
      // Predicated region
      $region36: #{custom-call.8} parent=5 // pred_check
        _
      $region37: #{custom-call.8} parent=5 // pred_check_branch
        %70 = sbr.rel (%p67) target = $region39
      $region38: #{custom-call.8} parent=5 // pred_region
        %s71 = ssub.s32 %s3, 1
        %s72 = sand.u32 %s8, 1
        %s73 = sand.u32 %s8, 1
        %s74 = smul.addr %s73, 32
        %s75 = scalar_lea.vmem [#allocation0], %s74
        %s76 = sand.u32 %s8, 1
        %s77 = sand.u32 %s8, 1
        %s78 = smul.addr %s77, 32
        %s79 = scalar_lea.vmem [#allocation0], %s78
        %s80 = sand.u32 %s8, 1
        %s81 = sand.u32 %s8, 1
        %s82 = smul.addr %s81, 32
        %s83 = scalar_lea.vmem [#allocation1], %s82
        %v84 = vlaneseq
        %v85 = vand.u32 %v84, 127
        %v86 = vlaneseq
        %v87 = vshrl.u32 %v86, 7
        %vm89 = vcmp.eq.s32.totalorder %v85, %v87
        %v90 = vld [vmem:[%s75] sm:$0xff]
        %v91 = vlaneseq
        %v92 = vand.u32 %v91, 127
        %vm93 = vcmp.eq.s32.totalorder %v92, 0
        %v94 = vsel %vm93, %v90, 1.0
        %v95 = vsel %vm89, %v94, 0.0
        %v96 = vlaneseq
        %v97 = vand.u32 %v96, 127
        %v98 = vlaneseq
        %v99 = vshrl.u32 %v98, 7
        %v100 = vadd.s32 %v99, 8
        %vm101 = vcmp.eq.s32.totalorder %v97, %v100
        %v102 = vsel %vm101, 1.0, 0.0
        %v103 = vlaneseq
        %v104 = vand.u32 %v103, 127
        %v105 = vlaneseq
        %v106 = vshrl.u32 %v105, 7
        %v107 = vadd.s32 %v106, 16
        %vm108 = vcmp.eq.s32.totalorder %v104, %v107
        %v109 = vsel %vm108, 1.0, 0.0
        %v110 = vlaneseq
        %v111 = vand.u32 %v110, 127
        %v112 = vlaneseq
        %v113 = vshrl.u32 %v112, 7
        %v114 = vadd.s32 %v113, 24
        %vm115 = vcmp.eq.s32.totalorder %v111, %v114
        %v116 = vsel %vm115, 1.0, 0.0
        %s117 = scalar_lea.vmem %s75, 1 [#allocation0]
        %v118 = vld [vmem:[%s117] ss:$0 sm:$0xff]
        %vm119 = vcmask 261120
        %v120 = vsel %vm119, %v118, 0.0
        %v121 = vlaneseq
        %v122 = vand.u32 %v121, 127
        %vm123 = vcmp.eq.s32.totalorder %v122, 1
        %v124 = vmul.f32 %v120, %v95
        %125 = vadd.xlane.f32.xlu0 %v124
        %v126 = vpop.xlane.xlu0 %125
        %v127 = vsel %vm123, %v126, %v95
        %s128 = scalar_lea.vmem %s75, 2 [#allocation0]
        %v129 = vld [vmem:[%s128] ss:$0 sm:$0xff]
        %vm130 = vcmask 261120
        %v131 = vsel %vm130, %v129, 0.0
        %v132 = vlaneseq
        %v133 = vand.u32 %v132, 127
        %vm134 = vcmp.eq.s32.totalorder %v133, 2
        %v135 = vmul.f32 %v131, %v127
        %136 = vadd.xlane.f32.xlu0 %v135
        %v137 = vpop.xlane.xlu0 %136
        %v138 = vsel %vm134, %v137, %v127
        %s139 = scalar_lea.vmem %s75, 3 [#allocation0]
        %v140 = vld [vmem:[%s139] ss:$0 sm:$0xff]
        %vm141 = vcmask 261120
        %v142 = vsel %vm141, %v140, 0.0
        %v143 = vlaneseq
        %v144 = vand.u32 %v143, 127
        %vm145 = vcmp.eq.s32.totalorder %v144, 3
        %v146 = vmul.f32 %v142, %v138
        %147 = vadd.xlane.f32.xlu0 %v146
        %v148 = vpop.xlane.xlu0 %147
        %v149 = vsel %vm145, %v148, %v138
        %s150 = scalar_lea.vmem %s75, 4 [#allocation0]
        %v151 = vld [vmem:[%s150] ss:$0 sm:$0xff]
        %vm152 = vcmask 261120
        %v153 = vsel %vm152, %v151, 0.0
        %v154 = vlaneseq
        %v155 = vand.u32 %v154, 127
        %vm156 = vcmp.eq.s32.totalorder %v155, 4
        %v157 = vmul.f32 %v153, %v149
        %158 = vadd.xlane.f32.xlu0 %v157
        %v159 = vpop.xlane.xlu0 %158
        %v160 = vsel %vm156, %v159, %v149
        %s161 = scalar_lea.vmem %s75, 5 [#allocation0]
        %v162 = vld [vmem:[%s161] ss:$0 sm:$0xff]
        %vm163 = vcmask 261120
        %v164 = vsel %vm163, %v162, 0.0
        %v165 = vlaneseq
        %v166 = vand.u32 %v165, 127
        %vm167 = vcmp.eq.s32.totalorder %v166, 5
        %v168 = vmul.f32 %v164, %v160
        %169 = vadd.xlane.f32.xlu0 %v168
        %v170 = vpop.xlane.xlu0 %169
        %v171 = vsel %vm167, %v170, %v160
        %s172 = scalar_lea.vmem %s75, 6 [#allocation0]
        %v173 = vld [vmem:[%s172] ss:$0 sm:$0xff]
        %vm174 = vcmask 261120
        %v175 = vsel %vm174, %v173, 0.0
        %v176 = vlaneseq
        %v177 = vand.u32 %v176, 127
        %vm178 = vcmp.eq.s32.totalorder %v177, 6
        %v179 = vmul.f32 %v175, %v171
        %180 = vadd.xlane.f32.xlu0 %v179
        %v181 = vpop.xlane.xlu0 %180
        %v182 = vsel %vm178, %v181, %v171
        %s183 = scalar_lea.vmem %s75, 7 [#allocation0]
        %v184 = vld [vmem:[%s183] ss:$0 sm:$0xff]
        %vm185 = vcmask 261120
        %v186 = vsel %vm185, %v184, 0.0
        %v187 = vlaneseq
        %v188 = vand.u32 %v187, 127
        %vm189 = vcmp.eq.s32.totalorder %v188, 7
        %v190 = vmul.f32 %v186, %v182
        %191 = vadd.xlane.f32.xlu0 %v190
        %v192 = vpop.xlane.xlu0 %191
        %v193 = vsel %vm189, %v192, %v182
        %s194 = scalar_lea.vmem %s75, 8 [#allocation0]
        %v195 = vld [vmem:[%s194] ss:$0 sm:$0xff]
        %vm196 = vcmask 261120
        %v197 = vsel %vm196, %v195, 0.0
        %v198 = vlaneseq
        %v199 = vand.u32 %v198, 127
        %vm200 = vcmp.eq.s32.totalorder %v199, 8
        %v201 = vmul.f32 %v197, %v193
        %202 = vadd.xlane.f32.xlu0 %v201
        %v203 = vpop.xlane.xlu0 %202
        %v204 = vsel %vm200, %v203, %v193
        %v205 = vmul.f32 %v197, %v102
        %206 = vadd.xlane.f32.xlu0 %v205
        %v207 = vpop.xlane.xlu0 %206
        %v208 = vsel %vm200, %v207, %v102
        %s209 = scalar_lea.vmem %s75, 9 [#allocation0]
        %v210 = vld [vmem:[%s209] ss:$0 sm:$0xff]
        %vm211 = vcmask 261120
        %v212 = vsel %vm211, %v210, 0.0
        %v213 = vlaneseq
        %v214 = vand.u32 %v213, 127
        %vm215 = vcmp.eq.s32.totalorder %v214, 9
        %v216 = vmul.f32 %v212, %v204
        %217 = vadd.xlane.f32.xlu0 %v216
        %v218 = vpop.xlane.xlu0 %217
        %v219 = vsel %vm215, %v218, %v204
        %v220 = vmul.f32 %v212, %v208
        %221 = vadd.xlane.f32.xlu0 %v220
        %v222 = vpop.xlane.xlu0 %221
        %v223 = vsel %vm215, %v222, %v208
        %s224 = scalar_lea.vmem %s75, 10 [#allocation0]
        %v225 = vld [vmem:[%s224] ss:$0 sm:$0xff]
        %vm226 = vcmask 261120
        %v227 = vsel %vm226, %v225, 0.0
        %v228 = vlaneseq
        %v229 = vand.u32 %v228, 127
        %vm230 = vcmp.eq.s32.totalorder %v229, 10
        %v231 = vmul.f32 %v227, %v219
        %232 = vadd.xlane.f32.xlu0 %v231
        %v233 = vpop.xlane.xlu0 %232
        %v234 = vsel %vm230, %v233, %v219
        %v235 = vmul.f32 %v227, %v223
        %236 = vadd.xlane.f32.xlu0 %v235
        %v237 = vpop.xlane.xlu0 %236
        %v238 = vsel %vm230, %v237, %v223
        %s239 = scalar_lea.vmem %s75, 11 [#allocation0]
        %v240 = vld [vmem:[%s239] ss:$0 sm:$0xff]
        %vm241 = vcmask 261120
        %v242 = vsel %vm241, %v240, 0.0
        %v243 = vlaneseq
        %v244 = vand.u32 %v243, 127
        %vm245 = vcmp.eq.s32.totalorder %v244, 11
        %v246 = vmul.f32 %v242, %v234
        %247 = vadd.xlane.f32.xlu0 %v246
        %v248 = vpop.xlane.xlu0 %247
        %v249 = vsel %vm245, %v248, %v234
        %v250 = vmul.f32 %v242, %v238
        %251 = vadd.xlane.f32.xlu0 %v250
        %v252 = vpop.xlane.xlu0 %251
        %v253 = vsel %vm245, %v252, %v238
        %s254 = scalar_lea.vmem %s75, 12 [#allocation0]
        %v255 = vld [vmem:[%s254] ss:$0 sm:$0xff]
        %vm256 = vcmask 261120
        %v257 = vsel %vm256, %v255, 0.0
        %v258 = vlaneseq
        %v259 = vand.u32 %v258, 127
        %vm260 = vcmp.eq.s32.totalorder %v259, 12
        %v261 = vmul.f32 %v257, %v249
        %262 = vadd.xlane.f32.xlu0 %v261
        %v263 = vpop.xlane.xlu0 %262
        %v264 = vsel %vm260, %v263, %v249
        %v265 = vmul.f32 %v257, %v253
        %266 = vadd.xlane.f32.xlu0 %v265
        %v267 = vpop.xlane.xlu0 %266
        %v268 = vsel %vm260, %v267, %v253
        %s269 = scalar_lea.vmem %s75, 13 [#allocation0]
        %v270 = vld [vmem:[%s269] ss:$0 sm:$0xff]
        %vm271 = vcmask 261120
        %v272 = vsel %vm271, %v270, 0.0
        %v273 = vlaneseq
        %v274 = vand.u32 %v273, 127
        %vm275 = vcmp.eq.s32.totalorder %v274, 13
        %v276 = vmul.f32 %v272, %v264
        %277 = vadd.xlane.f32.xlu0 %v276
        %v278 = vpop.xlane.xlu0 %277
        %v279 = vsel %vm275, %v278, %v264
        %v280 = vmul.f32 %v272, %v268
        %281 = vadd.xlane.f32.xlu0 %v280
        %v282 = vpop.xlane.xlu0 %281
        %v283 = vsel %vm275, %v282, %v268
        %s284 = scalar_lea.vmem %s75, 14 [#allocation0]
        %v285 = vld [vmem:[%s284] ss:$0 sm:$0xff]
        %vm286 = vcmask 261120
        %v287 = vsel %vm286, %v285, 0.0
        %v288 = vlaneseq
        %v289 = vand.u32 %v288, 127
        %vm290 = vcmp.eq.s32.totalorder %v289, 14
        %v291 = vmul.f32 %v287, %v279
        %292 = vadd.xlane.f32.xlu0 %v291
        %v293 = vpop.xlane.xlu0 %292
        %v294 = vsel %vm290, %v293, %v279
        %v295 = vmul.f32 %v287, %v283
        %296 = vadd.xlane.f32.xlu0 %v295
        %v297 = vpop.xlane.xlu0 %296
        %v298 = vsel %vm290, %v297, %v283
        %s299 = scalar_lea.vmem %s75, 15 [#allocation0]
        %v300 = vld [vmem:[%s299] ss:$0 sm:$0xff]
        %vm301 = vcmask 261120
        %v302 = vsel %vm301, %v300, 0.0
        %v303 = vlaneseq
        %v304 = vand.u32 %v303, 127
        %vm305 = vcmp.eq.s32.totalorder %v304, 15
        %v306 = vmul.f32 %v302, %v294
        %307 = vadd.xlane.f32.xlu0 %v306
        %v308 = vpop.xlane.xlu0 %307
        %v309 = vsel %vm305, %v308, %v294
        %v310 = vmul.f32 %v302, %v298
        %311 = vadd.xlane.f32.xlu0 %v310
        %v312 = vpop.xlane.xlu0 %311
        %v313 = vsel %vm305, %v312, %v298
        %s314 = scalar_lea.vmem %s75, 16 [#allocation0]
        %v315 = vld [vmem:[%s314] ss:$0 sm:$0xff]
        %vm316 = vcmask 261120
        %v317 = vsel %vm316, %v315, 0.0
        %v318 = vlaneseq
        %v319 = vand.u32 %v318, 127
        %vm320 = vcmp.eq.s32.totalorder %v319, 16
        %v321 = vmul.f32 %v317, %v309
        %322 = vadd.xlane.f32.xlu0 %v321
        %v323 = vpop.xlane.xlu0 %322
        %v324 = vsel %vm320, %v323, %v309
        %v325 = vmul.f32 %v317, %v313
        %326 = vadd.xlane.f32.xlu0 %v325
        %v327 = vpop.xlane.xlu0 %326
        %v328 = vsel %vm320, %v327, %v313
        %v329 = vmul.f32 %v317, %v109
        %330 = vadd.xlane.f32.xlu0 %v329
        %v331 = vpop.xlane.xlu0 %330
        %v332 = vsel %vm320, %v331, %v109
        %s333 = scalar_lea.vmem %s75, 17 [#allocation0]
        %v334 = vld [vmem:[%s333] ss:$0 sm:$0xff]
        %vm335 = vcmask 261120
        %v336 = vsel %vm335, %v334, 0.0
        %v337 = vlaneseq
        %v338 = vand.u32 %v337, 127
        %vm339 = vcmp.eq.s32.totalorder %v338, 17
        %v340 = vmul.f32 %v336, %v324
        %341 = vadd.xlane.f32.xlu0 %v340
        %v342 = vpop.xlane.xlu0 %341
        %v343 = vsel %vm339, %v342, %v324
        %v344 = vmul.f32 %v336, %v328
        %345 = vadd.xlane.f32.xlu0 %v344
        %v346 = vpop.xlane.xlu0 %345
        %v347 = vsel %vm339, %v346, %v328
        %v348 = vmul.f32 %v336, %v332
        %349 = vadd.xlane.f32.xlu0 %v348
        %v350 = vpop.xlane.xlu0 %349
        %v351 = vsel %vm339, %v350, %v332
        %s352 = scalar_lea.vmem %s75, 18 [#allocation0]
        %v353 = vld [vmem:[%s352] ss:$0 sm:$0xff]
        %vm354 = vcmask 261120
        %v355 = vsel %vm354, %v353, 0.0
        %v356 = vlaneseq
        %v357 = vand.u32 %v356, 127
        %vm358 = vcmp.eq.s32.totalorder %v357, 18
        %v359 = vmul.f32 %v355, %v343
        %360 = vadd.xlane.f32.xlu0 %v359
        %v361 = vpop.xlane.xlu0 %360
        %v362 = vsel %vm358, %v361, %v343
        %v363 = vmul.f32 %v355, %v347
        %364 = vadd.xlane.f32.xlu0 %v363
        %v365 = vpop.xlane.xlu0 %364
        %v366 = vsel %vm358, %v365, %v347
        %v367 = vmul.f32 %v355, %v351
        %368 = vadd.xlane.f32.xlu0 %v367
        %v369 = vpop.xlane.xlu0 %368
        %v370 = vsel %vm358, %v369, %v351
        %s371 = scalar_lea.vmem %s75, 19 [#allocation0]
        %v372 = vld [vmem:[%s371] ss:$0 sm:$0xff]
        %vm373 = vcmask 261120
        %v374 = vsel %vm373, %v372, 0.0
        %v375 = vlaneseq
        %v376 = vand.u32 %v375, 127
        %vm377 = vcmp.eq.s32.totalorder %v376, 19
        %v378 = vmul.f32 %v374, %v362
        %379 = vadd.xlane.f32.xlu0 %v378
        %v380 = vpop.xlane.xlu0 %379
        %v381 = vsel %vm377, %v380, %v362
        %v382 = vmul.f32 %v374, %v366
        %383 = vadd.xlane.f32.xlu0 %v382
        %v384 = vpop.xlane.xlu0 %383
        %v385 = vsel %vm377, %v384, %v366
        %v386 = vmul.f32 %v374, %v370
        %387 = vadd.xlane.f32.xlu0 %v386
        %v388 = vpop.xlane.xlu0 %387
        %v389 = vsel %vm377, %v388, %v370
        %s390 = scalar_lea.vmem %s75, 20 [#allocation0]
        %v391 = vld [vmem:[%s390] ss:$0 sm:$0xff]
        %vm392 = vcmask 261120
        %v393 = vsel %vm392, %v391, 0.0
        %v394 = vlaneseq
        %v395 = vand.u32 %v394, 127
        %vm396 = vcmp.eq.s32.totalorder %v395, 20
        %v397 = vmul.f32 %v393, %v381
        %398 = vadd.xlane.f32.xlu0 %v397
        %v399 = vpop.xlane.xlu0 %398
        %v400 = vsel %vm396, %v399, %v381
        %v401 = vmul.f32 %v393, %v385
        %402 = vadd.xlane.f32.xlu0 %v401
        %v403 = vpop.xlane.xlu0 %402
        %v404 = vsel %vm396, %v403, %v385
        %v405 = vmul.f32 %v393, %v389
        %406 = vadd.xlane.f32.xlu0 %v405
        %v407 = vpop.xlane.xlu0 %406
        %v408 = vsel %vm396, %v407, %v389
        %s409 = scalar_lea.vmem %s75, 21 [#allocation0]
        %v410 = vld [vmem:[%s409] ss:$0 sm:$0xff]
        %vm411 = vcmask 261120
        %v412 = vsel %vm411, %v410, 0.0
        %v413 = vlaneseq
        %v414 = vand.u32 %v413, 127
        %vm415 = vcmp.eq.s32.totalorder %v414, 21
        %v416 = vmul.f32 %v412, %v400
        %417 = vadd.xlane.f32.xlu0 %v416
        %v418 = vpop.xlane.xlu0 %417
        %v419 = vsel %vm415, %v418, %v400
        %v420 = vmul.f32 %v412, %v404
        %421 = vadd.xlane.f32.xlu0 %v420
        %v422 = vpop.xlane.xlu0 %421
        %v423 = vsel %vm415, %v422, %v404
        %v424 = vmul.f32 %v412, %v408
        %425 = vadd.xlane.f32.xlu0 %v424
        %v426 = vpop.xlane.xlu0 %425
        %v427 = vsel %vm415, %v426, %v408
        %s428 = scalar_lea.vmem %s75, 22 [#allocation0]
        %v429 = vld [vmem:[%s428] ss:$0 sm:$0xff]
        %vm430 = vcmask 261120
        %v431 = vsel %vm430, %v429, 0.0
        %v432 = vlaneseq
        %v433 = vand.u32 %v432, 127
        %vm434 = vcmp.eq.s32.totalorder %v433, 22
        %v435 = vmul.f32 %v431, %v419
        %436 = vadd.xlane.f32.xlu0 %v435
        %v437 = vpop.xlane.xlu0 %436
        %v438 = vsel %vm434, %v437, %v419
        %v439 = vmul.f32 %v431, %v423
        %440 = vadd.xlane.f32.xlu0 %v439
        %v441 = vpop.xlane.xlu0 %440
        %v442 = vsel %vm434, %v441, %v423
        %v443 = vmul.f32 %v431, %v427
        %444 = vadd.xlane.f32.xlu0 %v443
        %v445 = vpop.xlane.xlu0 %444
        %v446 = vsel %vm434, %v445, %v427
        %s447 = scalar_lea.vmem %s75, 23 [#allocation0]
        %v448 = vld [vmem:[%s447] ss:$0 sm:$0xff]
        %vm449 = vcmask 261120
        %v450 = vsel %vm449, %v448, 0.0
        %v451 = vlaneseq
        %v452 = vand.u32 %v451, 127
        %vm453 = vcmp.eq.s32.totalorder %v452, 23
        %v454 = vmul.f32 %v450, %v438
        %455 = vadd.xlane.f32.xlu0 %v454
        %v456 = vpop.xlane.xlu0 %455
        %v457 = vsel %vm453, %v456, %v438
        %v458 = vmul.f32 %v450, %v442
        %459 = vadd.xlane.f32.xlu0 %v458
        %v460 = vpop.xlane.xlu0 %459
        %v461 = vsel %vm453, %v460, %v442
        %v462 = vmul.f32 %v450, %v446
        %463 = vadd.xlane.f32.xlu0 %v462
        %v464 = vpop.xlane.xlu0 %463
        %v465 = vsel %vm453, %v464, %v446
        %s466 = scalar_lea.vmem %s75, 24 [#allocation0]
        %v467 = vld [vmem:[%s466] ss:$0 sm:$0xff]
        %vm468 = vcmask 261120
        %v469 = vsel %vm468, %v467, 0.0
        %v470 = vlaneseq
        %v471 = vand.u32 %v470, 127
        %vm472 = vcmp.eq.s32.totalorder %v471, 24
        %v473 = vmul.f32 %v469, %v457
        %474 = vadd.xlane.f32.xlu0 %v473
        %v475 = vpop.xlane.xlu0 %474
        %v476 = vsel %vm472, %v475, %v457
        %v477 = vmul.f32 %v469, %v461
        %478 = vadd.xlane.f32.xlu0 %v477
        %v479 = vpop.xlane.xlu0 %478
        %v480 = vsel %vm472, %v479, %v461
        %v481 = vmul.f32 %v469, %v465
        %482 = vadd.xlane.f32.xlu0 %v481
        %v483 = vpop.xlane.xlu0 %482
        %v484 = vsel %vm472, %v483, %v465
        %v485 = vmul.f32 %v469, %v116
        %486 = vadd.xlane.f32.xlu0 %v485
        %v487 = vpop.xlane.xlu0 %486
        %v488 = vsel %vm472, %v487, %v116
        %s489 = scalar_lea.vmem %s75, 25 [#allocation0]
        %v490 = vld [vmem:[%s489] ss:$0 sm:$0xff]
        %vm491 = vcmask 261120
        %v492 = vsel %vm491, %v490, 0.0
        %v493 = vlaneseq
        %v494 = vand.u32 %v493, 127
        %vm495 = vcmp.eq.s32.totalorder %v494, 25
        %v496 = vmul.f32 %v492, %v476
        %497 = vadd.xlane.f32.xlu0 %v496
        %v498 = vpop.xlane.xlu0 %497
        %v499 = vsel %vm495, %v498, %v476
        %v500 = vmul.f32 %v492, %v480
        %501 = vadd.xlane.f32.xlu0 %v500
        %v502 = vpop.xlane.xlu0 %501
        %v503 = vsel %vm495, %v502, %v480
        %v504 = vmul.f32 %v492, %v484
        %505 = vadd.xlane.f32.xlu0 %v504
        %v506 = vpop.xlane.xlu0 %505
        %v507 = vsel %vm495, %v506, %v484
        %v508 = vmul.f32 %v492, %v488
        %509 = vadd.xlane.f32.xlu0 %v508
        %v510 = vpop.xlane.xlu0 %509
        %v511 = vsel %vm495, %v510, %v488
        %s512 = scalar_lea.vmem %s75, 26 [#allocation0]
        %v513 = vld [vmem:[%s512] ss:$0 sm:$0xff]
        %vm514 = vcmask 261120
        %v515 = vsel %vm514, %v513, 0.0
        %v516 = vlaneseq
        %v517 = vand.u32 %v516, 127
        %vm518 = vcmp.eq.s32.totalorder %v517, 26
        %v519 = vmul.f32 %v515, %v499
        %520 = vadd.xlane.f32.xlu0 %v519
        %v521 = vpop.xlane.xlu0 %520
        %v522 = vsel %vm518, %v521, %v499
        %v523 = vmul.f32 %v515, %v503
        %524 = vadd.xlane.f32.xlu0 %v523
        %v525 = vpop.xlane.xlu0 %524
        %v526 = vsel %vm518, %v525, %v503
        %v527 = vmul.f32 %v515, %v507
        %528 = vadd.xlane.f32.xlu0 %v527
        %v529 = vpop.xlane.xlu0 %528
        %v530 = vsel %vm518, %v529, %v507
        %v531 = vmul.f32 %v515, %v511
        %532 = vadd.xlane.f32.xlu0 %v531
        %v533 = vpop.xlane.xlu0 %532
        %v534 = vsel %vm518, %v533, %v511
        %s535 = scalar_lea.vmem %s75, 27 [#allocation0]
        %v536 = vld [vmem:[%s535] ss:$0 sm:$0xff]
        %vm537 = vcmask 261120
        %v538 = vsel %vm537, %v536, 0.0
        %v539 = vlaneseq
        %v540 = vand.u32 %v539, 127
        %vm541 = vcmp.eq.s32.totalorder %v540, 27
        %v542 = vmul.f32 %v538, %v522
        %543 = vadd.xlane.f32.xlu0 %v542
        %v544 = vpop.xlane.xlu0 %543
        %v545 = vsel %vm541, %v544, %v522
        %v546 = vmul.f32 %v538, %v526
        %547 = vadd.xlane.f32.xlu0 %v546
        %v548 = vpop.xlane.xlu0 %547
        %v549 = vsel %vm541, %v548, %v526
        %v550 = vmul.f32 %v538, %v530
        %551 = vadd.xlane.f32.xlu0 %v550
        %v552 = vpop.xlane.xlu0 %551
        %v553 = vsel %vm541, %v552, %v530
        %v554 = vmul.f32 %v538, %v534
        %555 = vadd.xlane.f32.xlu0 %v554
        %v556 = vpop.xlane.xlu0 %555
        %v557 = vsel %vm541, %v556, %v534
        %s558 = scalar_lea.vmem %s75, 28 [#allocation0]
        %v559 = vld [vmem:[%s558] ss:$0 sm:$0xff]
        %vm560 = vcmask 261120
        %v561 = vsel %vm560, %v559, 0.0
        %v562 = vlaneseq
        %v563 = vand.u32 %v562, 127
        %vm564 = vcmp.eq.s32.totalorder %v563, 28
        %v565 = vmul.f32 %v561, %v545
        %566 = vadd.xlane.f32.xlu0 %v565
        %v567 = vpop.xlane.xlu0 %566
        %v568 = vsel %vm564, %v567, %v545
        %v569 = vmul.f32 %v561, %v549
        %570 = vadd.xlane.f32.xlu0 %v569
        %v571 = vpop.xlane.xlu0 %570
        %v572 = vsel %vm564, %v571, %v549
        %v573 = vmul.f32 %v561, %v553
        %574 = vadd.xlane.f32.xlu0 %v573
        %v575 = vpop.xlane.xlu0 %574
        %v576 = vsel %vm564, %v575, %v553
        %v577 = vmul.f32 %v561, %v557
        %578 = vadd.xlane.f32.xlu0 %v577
        %v579 = vpop.xlane.xlu0 %578
        %v580 = vsel %vm564, %v579, %v557
        %s581 = scalar_lea.vmem %s75, 29 [#allocation0]
        %v582 = vld [vmem:[%s581] ss:$0 sm:$0xff]
        %vm583 = vcmask 261120
        %v584 = vsel %vm583, %v582, 0.0
        %v585 = vlaneseq
        %v586 = vand.u32 %v585, 127
        %vm587 = vcmp.eq.s32.totalorder %v586, 29
        %v588 = vmul.f32 %v584, %v568
        %589 = vadd.xlane.f32.xlu0 %v588
        %v590 = vpop.xlane.xlu0 %589
        %v591 = vsel %vm587, %v590, %v568
        %v592 = vmul.f32 %v584, %v572
        %593 = vadd.xlane.f32.xlu0 %v592
        %v594 = vpop.xlane.xlu0 %593
        %v595 = vsel %vm587, %v594, %v572
        %v596 = vmul.f32 %v584, %v576
        %597 = vadd.xlane.f32.xlu0 %v596
        %v598 = vpop.xlane.xlu0 %597
        %v599 = vsel %vm587, %v598, %v576
        %v600 = vmul.f32 %v584, %v580
        %601 = vadd.xlane.f32.xlu0 %v600
        %v602 = vpop.xlane.xlu0 %601
        %v603 = vsel %vm587, %v602, %v580
        %s604 = scalar_lea.vmem %s75, 30 [#allocation0]
        %v605 = vld [vmem:[%s604] ss:$0 sm:$0xff]
        %vm606 = vcmask 261120
        %v607 = vsel %vm606, %v605, 0.0
        %v608 = vlaneseq
        %v609 = vand.u32 %v608, 127
        %vm610 = vcmp.eq.s32.totalorder %v609, 30
        %v611 = vmul.f32 %v607, %v591
        %612 = vadd.xlane.f32.xlu0 %v611
        %v613 = vpop.xlane.xlu0 %612
        %v614 = vsel %vm610, %v613, %v591
        %v615 = vmul.f32 %v607, %v595
        %616 = vadd.xlane.f32.xlu0 %v615
        %v617 = vpop.xlane.xlu0 %616
        %v618 = vsel %vm610, %v617, %v595
        %v619 = vmul.f32 %v607, %v599
        %620 = vadd.xlane.f32.xlu0 %v619
        %v621 = vpop.xlane.xlu0 %620
        %v622 = vsel %vm610, %v621, %v599
        %v623 = vmul.f32 %v607, %v603
        %624 = vadd.xlane.f32.xlu0 %v623
        %v625 = vpop.xlane.xlu0 %624
        %v626 = vsel %vm610, %v625, %v603
        %s627 = scalar_lea.vmem %s75, 31 [#allocation0]
        %v628 = vld [vmem:[%s627] ss:$0 sm:$0xff]
        %vm629 = vcmask 261120
        %v630 = vsel %vm629, %v628, 0.0
        %v631 = vlaneseq
        %v632 = vand.u32 %v631, 127
        %vm633 = vcmp.eq.s32.totalorder %v632, 31
        %v634 = vmul.f32 %v630, %v614
        %635 = vadd.xlane.f32.xlu0 %v634
        %v636 = vpop.xlane.xlu0 %635
        %v637 = vsel %vm633, %v636, %v614
        %v638 = vmul.f32 %v630, %v618
        %639 = vadd.xlane.f32.xlu0 %v638
        %v640 = vpop.xlane.xlu0 %639
        %v641 = vsel %vm633, %v640, %v618
        %v642 = vmul.f32 %v630, %v622
        %643 = vadd.xlane.f32.xlu0 %v642
        %v644 = vpop.xlane.xlu0 %643
        %v645 = vsel %vm633, %v644, %v622
        %v646 = vmul.f32 %v630, %v626
        %647 = vadd.xlane.f32.xlu0 %v646
        %v648 = vpop.xlane.xlu0 %647
        %v649 = vsel %vm633, %v648, %v626
        %650 = vst [vmem:[%s83] sm:$0xff] %v637
        %s651 = scalar_lea.vmem %s83, 8 [#allocation1]
        %652 = vst [vmem:[%s651] sm:$0xff] %v641
        %s653 = scalar_lea.vmem %s83, 16 [#allocation1]
        %654 = vst [vmem:[%s653] sm:$0xff] %v645
        %s655 = scalar_lea.vmem %s83, 24 [#allocation1]
        %656 = vst [vmem:[%s655] sm:$0xff] %v649
        %s657 = sand.u32 %s8, 1
        %s658 = sand.u32 %s8, 1
        %s659 = smul.addr %s658, 32
        %s660 = scalar_lea.vmem [#allocation1], %s659
        %s661 = smul.addr %s12, 4
        %s662 = sadd.s32 %s13, %s661
        %s663 = smul.addr %s662, 32
        %s664 = scalar_lea.vmem %s1, %s663
        // Predicated region
        $region40: #{custom-call.8} parent=38 // pred_check
          _
        $region41: #{custom-call.8} parent=38 // pred_check_branch
          %666 = sbr.rel (0) target = $region43
        $region42: #{custom-call.8} parent=38 // pred_region
          // Predicated region
          $region44: #{custom-call.8} parent=42 // pred_check
            _
          $region45: #{custom-call.8} parent=42 // pred_check_branch
            %668 = sbr.rel (0) target = $region47
          $region46: #{custom-call.8} parent=42 // pred_region
            loop: start=0, step=1, limit=1
            $region48: #{custom-call.8} parent=46 // loop_pre_header
              _
            $region49: #{custom-call.8} parent=46 // loop_header
              %s670 = sphi 0, %s674
              %p671 = scmp.ge.s32.totalorder %s670, 1
              %s675 = sphi %s660, %s660
              %s676 = sphi %s664, %s664
            $region50: #{custom-call.8} parent=46 // loop_header_branch
              %673 = sbr.rel (%p671) target = $region54
            $region51: #{custom-call.8} parent=46 // loop_body
              %v677 = vld [vmem:[%s675] sm:$0xff]
              %678 = vst [vmem:[%s676] sm:$0xff] %v677
              %v679 = vld [vmem:[%s675 + $0x8] sm:$0xff]
              %680 = vst [vmem:[%s676 + $0x8] sm:$0xff] %v679
              %v681 = vld [vmem:[%s675 + $0x10] sm:$0xff]
              %682 = vst [vmem:[%s676 + $0x10] sm:$0xff] %v681
              %v683 = vld [vmem:[%s675 + $0x18] sm:$0xff]
              %684 = vst [vmem:[%s676 + $0x18] sm:$0xff] %v683
            $region52: #{custom-call.8} parent=46 // loop_footer
              %s674 = sadd.s32 1, %s670
            $region53: #{custom-call.8} parent=46 // loop_footer_branch
              %669 = sbr.rel target = $region49
            $region54: #{custom-call.8} parent=46 // loop_exit
              _
          $region47: #{custom-call.8} parent=42 // pred_fallthru
            _
          // Predicated region
          $region55: #{custom-call.8} parent=42 // pred_check
            _
          $region56: #{custom-call.8} parent=42 // pred_check_branch
            %686 = sbr.rel target = $region58
          $region57: #{custom-call.8} parent=42 // pred_region
            _
          $region58: #{custom-call.8} parent=42 // pred_fallthru
            _
        $region43: #{custom-call.8} parent=38 // pred_fallthru
          _
        %687 = vnop
      $region39: #{custom-call.8} parent=5 // pred_fallthru
        _
      %p688 = scmp.le.s32.totalorder 2, %s3
      // Predicated region
      $region59: #{custom-call.8} parent=5 // pred_check
        %p689 = pneg %p688
      $region60: #{custom-call.8} parent=5 // pred_check_branch
        %691 = sbr.rel (%p689) target = $region62
      $region61: #{custom-call.8} parent=5 // pred_region
        %s692 = ssub.s32 %s3, 2
        %s693 = sand.u32 %s9, 1
        %s694 = sand.u32 %s9, 1
        %s695 = smul.addr %s694, 32
        %s696 = scalar_lea.vmem [#allocation1], %s695
      $region62: #{custom-call.8} parent=5 // pred_fallthru
        _
    $region6: #{custom-call.8} parent=1 // loop_footer
      %s7 = sadd.s32 1, %s3
    $region7: #{custom-call.8} parent=1 // loop_footer_branch
      %2 = sbr.rel target = $region3
    $region8: #{custom-call.8} parent=1 // loop_exit
      _

// kernel: redraw_projection_matrices.3
$region0: #{redraw_projection_matrices.3}
  #allocation0 [shape = 'u32[]', space=smem, size = 0x4, offset = 0x4, fixed_abs, tag = 'smem constant byte address 0x4 - core index']
  #allocation1 [shape = 'u32[144,128]{1,0:T(1,128)}', space=vmem, size = 0x12000, scoped, tag = 'internal scratch']
  %s0 = inlined_call_operand.vmem [shape: f32[2,32,128], index: 0, kind: input, shape index: {}]
  %s1 = inlined_call_operand.vmem [shape: f32[2,32,128], index: 1, kind: input, shape index: {}]
  %s2 = inlined_call_operand.hbm [shape: f32[2,32,128], index: 2, kind: output, shape index: {}]
  %s3 = sld [smem:[#allocation0]]
  $region41: #{redraw_projection_matrices.3} parent=0
    _
  %s5 = ssub.s32 1, %s3
  %s6 = scalar_select 0, %s5, %s3
  $region1: #{redraw_projection_matrices.3} parent=0
    #allocation2 [shape = 'u8[32768]{0}', space=vmem, size = 0x8000, scoped, tag = 'output window, operand 0']
    #allocation3 [shape = 's32[2]{0}', space=sflag, size = 0x8, scoped, tag = 'scoped memory for redraw_projection_matrices.3']
    %7 = vsyncpa [#allocation3], 0
    %s8 = scalar_lea.sflag [#allocation3], 1
    %9 = vsyncpa %s8, 0
    loop: start=0, step=1, limit=4
    $region2: #{redraw_projection_matrices.3} parent=1 // loop_pre_header
      _
    $region3: #{redraw_projection_matrices.3} parent=1 // loop_header
      %s11 = sphi 0, %s15
      %p12 = scmp.ge.s32.totalorder %s11, 4
      %s21 = sphi 0, %s23
      %s24 = sphi 0, %s21
      %s25 = sphi 0, %s24
      %s41 = sphi 0, %s25
      %s47 = sphi 0, %s49
      %s50 = sphi 0, %s47
      %s51 = sphi 0, %s50
      %s67 = sphi 0, %s51
      %s73 = sphi 0, %s75
      %s76 = sphi 0, %s73
      %s77 = sphi 0, %s76
      %s93 = sphi 0, %s77
    $region4: #{redraw_projection_matrices.3} parent=1 // loop_header_branch
      %14 = sbr.rel (%p12) target = $region8
    $region5: #{redraw_projection_matrices.3} parent=1 // loop_body
      %s16 = ssub.s32 %s11, 1
      %s17 = ssub.s32 %s11, 2
      %s18 = sadd.s32 %s11, 1
      %s19 = ssub.s32 %s11, %s18
      %p20 = scmp.eq.s32.totalorder %s19, 0
      %s22 = sadd.s32 %s21, 1
      %s23 = scalar_select %p20, %s21, %s22
      %p26 = pneg %p20
      %p27 = scmp.eq.s32.totalorder %s11, 1
      %p28 = por %p26, %p27
      %p29 = scmp.ne.s32.totalorder %s21, %s24
      %p30 = scmp.eq.s32.totalorder %s11, 0
      %p31 = por %p29, %p30
      %p32 = scmp.ne.s32.totalorder %s21, %s24
      %p33 = scmp.eq.s32.totalorder %s16, 1
      %p34 = por %p32, %p33
      %p35 = scmp.ne.s32.totalorder %s24, %s25
      %p36 = scmp.eq.s32.totalorder %s16, 0
      %p37 = por %p35, %p36
      %p38 = scmp.ne.s32.totalorder %s24, %s25
      %p39 = scmp.eq.s32.totalorder %s17, 1
      %p40 = por %p38, %p39
      %p42 = scmp.ne.s32.totalorder %s25, %s41
      %p43 = scmp.eq.s32.totalorder %s17, 0
      %p44 = por %p42, %p43
      %s45 = ssub.s32 %s11, %s18
      %p46 = scmp.eq.s32.totalorder %s45, 0
      %s48 = sadd.s32 %s47, 1
      %s49 = scalar_select %p46, %s47, %s48
      %p52 = pneg %p46
      %p53 = scmp.eq.s32.totalorder %s11, 1
      %p54 = por %p52, %p53
      %p55 = scmp.ne.s32.totalorder %s47, %s50
      %p56 = scmp.eq.s32.totalorder %s11, 0
      %p57 = por %p55, %p56
      %p58 = scmp.ne.s32.totalorder %s47, %s50
      %p59 = scmp.eq.s32.totalorder %s16, 1
      %p60 = por %p58, %p59
      %p61 = scmp.ne.s32.totalorder %s50, %s51
      %p62 = scmp.eq.s32.totalorder %s16, 0
      %p63 = por %p61, %p62
      %p64 = scmp.ne.s32.totalorder %s50, %s51
      %p65 = scmp.eq.s32.totalorder %s17, 1
      %p66 = por %p64, %p65
      %p68 = scmp.ne.s32.totalorder %s51, %s67
      %p69 = scmp.eq.s32.totalorder %s17, 0
      %p70 = por %p68, %p69
      %s71 = ssub.s32 %s11, %s18
      %p72 = scmp.eq.s32.totalorder %s71, 0
      %s74 = sadd.s32 %s73, 1
      %s75 = scalar_select %p72, %s73, %s74
      %p78 = pneg %p72
      %p79 = scmp.eq.s32.totalorder %s11, 1
      %p80 = por %p78, %p79
      %p81 = scmp.ne.s32.totalorder %s73, %s76
      %p82 = scmp.eq.s32.totalorder %s11, 0
      %p83 = por %p81, %p82
      %p84 = scmp.ne.s32.totalorder %s73, %s76
      %p85 = scmp.eq.s32.totalorder %s16, 1
      %p86 = por %p84, %p85
      %p87 = scmp.ne.s32.totalorder %s76, %s77
      %p88 = scmp.eq.s32.totalorder %s16, 0
      %p89 = por %p87, %p88
      %p90 = scmp.ne.s32.totalorder %s76, %s77
      %p91 = scmp.eq.s32.totalorder %s17, 1
      %p92 = por %p90, %p91
      %p94 = scmp.ne.s32.totalorder %s77, %s93
      %p95 = scmp.eq.s32.totalorder %s17, 0
      %p96 = por %p94, %p95
      %p97 = scmp.le.s32.totalorder 1, %s11
      %p98 = scmp.lt.s32.totalorder %s11, 3
      %p99 = pnand %p97, %p98
      %p100 = pneg %p99
      // Predicated region
      $region9: #{redraw_projection_matrices.3} parent=5 // pred_check
        _
      $region10: #{redraw_projection_matrices.3} parent=5 // pred_check_branch
        %102 = sbr.rel (%p99) target = $region12
      $region11: #{redraw_projection_matrices.3} parent=5 // pred_region
        %s103 = ssub.s32 %s11, 1
      $region12: #{redraw_projection_matrices.3} parent=5 // pred_fallthru
        _
      %p104 = scmp.lt.s32.totalorder %s11, 2
      // Predicated region
      $region13: #{redraw_projection_matrices.3} parent=5 // pred_check
        %p105 = pneg %p104
      $region14: #{redraw_projection_matrices.3} parent=5 // pred_check_branch
        %107 = sbr.rel (%p105) target = $region16
      $region15: #{redraw_projection_matrices.3} parent=5 // pred_region
        // Predicated region
        $region17: #{redraw_projection_matrices.3} parent=15 // pred_check
          %p108 = pneg %p31
        $region18: #{redraw_projection_matrices.3} parent=15 // pred_check_branch
          %110 = sbr.rel (%p108) target = $region20
        $region19: #{redraw_projection_matrices.3} parent=15 // pred_region
          %p111 = scmp.lt.s32.totalorder %s11, 1
          %s112 = scalar_select %p111, %s11, 1
          %s113 = smul.addr %s112, 4
          %s114 = smul.addr %s113, 8
          %s115 = scalar_lea.vmem %s0, %s114
        $region20: #{redraw_projection_matrices.3} parent=15 // pred_fallthru
          _
        // Predicated region
        $region21: #{redraw_projection_matrices.3} parent=15 // pred_check
          %p116 = pneg %p57
        $region22: #{redraw_projection_matrices.3} parent=15 // pred_check_branch
          %118 = sbr.rel (%p116) target = $region24
        $region23: #{redraw_projection_matrices.3} parent=15 // pred_region
          %p119 = scmp.lt.s32.totalorder %s11, 1
          %s120 = scalar_select %p119, %s11, 1
          %s121 = smul.addr %s120, 4
          %s122 = smul.addr %s121, 8
          %s123 = scalar_lea.vmem %s1, %s122
        $region24: #{redraw_projection_matrices.3} parent=15 // pred_fallthru
          _
      $region16: #{redraw_projection_matrices.3} parent=5 // pred_fallthru
        _
      %p124 = scmp.le.s32.totalorder 1, %s11
      %p125 = scmp.lt.s32.totalorder %s11, 3
      %p126 = pnand %p124, %p125
      %p127 = pneg %p126
      // Predicated region
      $region25: #{redraw_projection_matrices.3} parent=5 // pred_check
        _
      $region26: #{redraw_projection_matrices.3} parent=5 // pred_check_branch
        %129 = sbr.rel (%p126) target = $region28
      $region27: #{redraw_projection_matrices.3} parent=5 // pred_region
        %s130 = ssub.s32 %s11, 1
        %p131 = scmp.lt.s32.totalorder %s16, 1
        %s132 = scalar_select %p131, %s16, 1
        %s133 = smul.addr %s132, 4
        %s134 = smul.addr %s133, 8
        %s135 = scalar_lea.vmem %s0, %s134
        %p136 = pneg %p37
        %p137 = pneg %p34
        %p138 = scmp.lt.s32.totalorder %s16, 1
        %s139 = scalar_select %p138, %s16, 1
        %s140 = smul.addr %s139, 4
        %s141 = smul.addr %s140, 8
        %s142 = scalar_lea.vmem %s1, %s141
        %p143 = pneg %p63
        %p144 = pneg %p60
        %p145 = pneg %p89
        %p146 = pneg %p86
        %s147 = sand.u32 %s76, 1
        %s148 = scalar_lea.sflag [#allocation3], %s147
        %s149 = sand.u32 %s76, 1
        %s150 = smul.addr %s149, 32
        %s151 = scalar_lea.vmem [#allocation2], %s150
        %p152 = scmp.lt.s32.totalorder %s16, 1
        %s153 = scalar_select %p152, %s16, 1
        %s154 = smul.addr %s153, 4
        %s155 = smul.addr %s154, 8
        %s156 = scalar_lea.vmem %s0, %s155
        %p157 = scmp.lt.s32.totalorder %s16, 1
        %s158 = scalar_select %p157, %s16, 1
        %s159 = smul.addr %s158, 4
        %s160 = smul.addr %s159, 8
        %s161 = scalar_lea.vmem %s1, %s160
        %v162 = vld [vmem:[%s161] sm:$0xff]
        %v163 = vld [vmem:[%s161 + $0x8] sm:$0xff]
        %v164 = vld [vmem:[%s161 + $0x10] sm:$0xff]
        %v165 = vld [vmem:[%s161 + $0x18] sm:$0xff]
        %v166 = vmul.f32 %v162, %v162
        %v167 = vmul.f32 %v163, %v163
        %v168 = vmul.f32 %v164, %v164
        %v169 = vmul.f32 %v165, %v165
        %v170 = vadd.f32 %v166, %v167
        %v171 = vadd.f32 %v170, %v168
        %v172 = vadd.f32 %v171, %v169
        %v173 = vrot.slane %v172, 4
        %v174 = vadd.f32 %v172, %v173
        %v175 = vrot.slane %v174, 2
        %v176 = vadd.f32 %v174, %v175
        %v177 = vrot.slane %v176, 1
        %v178 = vadd.f32 %v176, %v177
        %v179 = vrsqrt.pop %v178
        %v180 = vmul.f32 %v178, %v179
        %vm181 = vcmp.eq.f32.partialorder %v178, inf
        %v182 = vsel %vm181, %v178, %v180
        %vm183 = vcmp.eq.f32.partialorder %v178, 0.0
        %v184 = vand.u32 %v178, 2147483648
        %v185 = vsel %vm183, %v184, %v182
        %v186 = vld [vmem:[%s156] sm:$0xff]
        %v187 = vld [vmem:[%s156 + $0x8] sm:$0xff]
        %v188 = vld [vmem:[%s156 + $0x10] sm:$0xff]
        %v189 = vld [vmem:[%s156 + $0x18] sm:$0xff]
        %v190 = vmul.f32 %v185, %v186
        %v191 = vmul.f32 %v185, %v187
        %v192 = vmul.f32 %v185, %v188
        %v193 = vmul.f32 %v185, %v189
        %194 = vst [vmem:[%s151] sm:$0xff] %v190
        %195 = vst [vmem:[%s151 + $0x8] sm:$0xff] %v191
        %196 = vst [vmem:[%s151 + $0x10] sm:$0xff] %v192
        %197 = vst [vmem:[%s151 + $0x18] sm:$0xff] %v193
        %s198 = sand.u32 %s76, 1
        %s199 = scalar_lea.sflag [#allocation3], %s198
        %s200 = sand.u32 %s76, 1
        %s201 = smul.addr %s200, 32
        %s202 = scalar_lea.vmem [#allocation2], %s201
        // Predicated region
        $region29: #{redraw_projection_matrices.3} parent=27 // pred_check
          %p203 = pneg %p86
        $region30: #{redraw_projection_matrices.3} parent=27 // pred_check_branch
          %205 = sbr.rel (%p203) target = $region32
        $region31: #{redraw_projection_matrices.3} parent=27 // pred_region
          %s207 = ssub.s32 512, 512
          %208 = vsyncadd %s199, %s207
          %s209 = smul.addr %s16, 4
          %s210 = smul.addr %s209, 128
          %s211 = scalar_lea.hbm %s2, %s210
          %s212 = sshll.u32 %s202, 4
          %s213 = int_to_ptr.vmem [resolvable:$true] %s212
          %218 = dma.vmem_to_hbm [thread:$0]  %s213, 512, %s211, %s199, 128, 128, 8
        $region32: #{redraw_projection_matrices.3} parent=27 // pred_fallthru
          _
      $region28: #{redraw_projection_matrices.3} parent=5 // pred_fallthru
        _
      %p219 = scmp.le.s32.totalorder 2, %s11
      // Predicated region
      $region33: #{redraw_projection_matrices.3} parent=5 // pred_check
        %p220 = pneg %p219
      $region34: #{redraw_projection_matrices.3} parent=5 // pred_check_branch
        %222 = sbr.rel (%p220) target = $region36
      $region35: #{redraw_projection_matrices.3} parent=5 // pred_region
        %s223 = ssub.s32 %s11, 2
        // Predicated region
        $region37: #{redraw_projection_matrices.3} parent=35 // pred_check
          %p224 = pneg %p92
        $region38: #{redraw_projection_matrices.3} parent=35 // pred_check_branch
          %226 = sbr.rel (%p224) target = $region40
        $region39: #{redraw_projection_matrices.3} parent=35 // pred_region
          %s227 = sand.u32 %s77, 1
          %s228 = scalar_lea.sflag [#allocation3], %s227
          %s229 = sand.u32 %s77, 1
          %s230 = smul.addr %s229, 32
          %s231 = scalar_lea.vmem [#allocation2], %s230
          %232 = dma.done %s228, 512
        $region40: #{redraw_projection_matrices.3} parent=35 // pred_fallthru
          _
      $region36: #{redraw_projection_matrices.3} parent=5 // pred_fallthru
        _
    $region6: #{redraw_projection_matrices.3} parent=1 // loop_footer
      %s15 = sadd.s32 1, %s11
    $region7: #{redraw_projection_matrices.3} parent=1 // loop_footer_branch
      %10 = sbr.rel target = $region3
    $region8: #{redraw_projection_matrices.3} parent=1 // loop_exit
      _
    %233 = vsyncpa [#allocation3], 1
    %s234 = scalar_lea.sflag [#allocation3], 1
    %235 = vsyncpa %s234, 1

</llo_original>
